<compile_context>
chip_gen: v6e
topology: v6e:2x2x1
jax: 0.10.0
libtpu: 0.0.40
codegen_flags: <defaults>
</compile_context>

<pallas_src>
import functools

import jax
import jax.numpy as jnp
from jax.experimental import pallas as pl
from jax.experimental.pallas import tpu as pltpu

_LEFT = 8    # aligned (multiple-of-8) left halo width in the padded scratch
_CHUNK = 8   # depthwise output rows per inner chunk (bounds live ranges)


def _round_up(x, m):
    return (x + m - 1) // m * m


def _ir_kernel(*refs, inp, oup, k, s, exp, se, H, W, Ho, Wo, p, Hp, Wc,
               has_expand, use_res):
    it = iter(refs)
    x_ref = next(it)
    if has_expand:
        w1_ref, sb1_ref = next(it), next(it)
    wd_ref, sbd_ref = next(it), next(it)
    if se:
        wse1_ref, wse2_ref = next(it), next(it)
    w2_ref, sb2_ref = next(it), next(it)
    o_ref = next(it)
    pad_ref = next(it)                 # zero-haloed expanded activation (VMEM)
    dw_ref = next(it)                  # depthwise output accumulator (VMEM)

    CL = _LEFT

    # ---- 1x1 expand conv (MXU, bf16 operands, f32 acc) + BN + ReLU --------
    x2 = x_ref[0].astype(jnp.float32).reshape(H * W, inp)
    if has_expand:
        h = jnp.dot(x2.astype(jnp.bfloat16), w1_ref[...],
                    preferred_element_type=jnp.float32)
        h = h * sb1_ref[0:1, :] + sb1_ref[1:2, :]
        h = jnp.maximum(h, 0.0)
    else:
        h = x2                                     # inp == exp: no expansion

    # ---- padded scratch: zero the halo only (interior fully overwritten) --
    # Zeroed every step (not @pl.when(first)) so it stays correct when the
    # "parallel" batch axis is split across TensorCores.
    pad_ref[:, 0:CL, :] = jnp.zeros((Hp, CL, exp), jnp.float32)
    pad_ref[:, CL + W:Wc, :] = jnp.zeros((Hp, Wc - CL - W, exp), jnp.float32)
    if p > 0:
        pad_ref[0:p, CL:CL + W, :] = jnp.zeros((p, W, exp), jnp.float32)
    if Hp - (p + H) > 0:
        pad_ref[p + H:Hp, CL:CL + W, :] = jnp.zeros((Hp - p - H, W, exp),
                                                    jnp.float32)
    # Interior store at sublane offset CL=8 (aligned -> unmasked vst).
    pad_ref[p:p + H, CL:CL + W, :] = h.reshape(H, W, exp)

    wdv = wd_ref[...]                              # (k, k, exp) dw weights

    # ---- depthwise k x k conv (stride s), chunked over output rows --------
    r0 = 0
    while r0 < Ho:
        rb = min(_CHUNK, Ho - r0)
        acc = jnp.zeros((rb, Wo, exp), jnp.float32)
        if s == 1:
            # Column shifts via XLU sublane rolls of the flattened row-slab;
            # wrap-around only lands in unused (halo) columns.
            nrows = rb + k - 1
            slab = pad_ref[r0:r0 + nrows, :, :].reshape(nrows * Wc, exp)
            for j in range(k):
                shift = (-(CL + j - p)) % (nrows * Wc)
                rolled = pltpu.roll(slab, shift=shift, axis=0)
                rolled = rolled.reshape(nrows, Wc, exp)
                for i in range(k):
                    acc = acc + (rolled[i:i + rb, 0:Wo, :]
                                 * wdv[i:i + 1, j:j + 1, :])
        else:
            # Stride-2: strided ref reads (no reshape-decimation relayouts).
            for i in range(k):
                for j in range(k):
                    win = pad_ref[pl.ds(r0 * s + i, rb, stride=s),
                                  pl.ds(CL + j - p, Wo, stride=s), :]
                    acc = acc + win * wdv[i:i + 1, j:j + 1, :]
        dw_ref[r0 * Wo:(r0 + rb) * Wo, :] = acc.reshape(rb * Wo, exp)
        r0 += rb

    # ---- BN + SE + ReLU + 1x1 project conv (MXU bf16) + BN + residual -----
    y2 = dw_ref[...]
    y2 = y2 * sbd_ref[0:1, :] + sbd_ref[1:2, :]    # folded eval-mode BN

    if se:  # Identity when se=False
        pooled = jnp.mean(y2, axis=0, keepdims=True)                 # (1, exp)
        # SE 1x1s as VPU multiply + XLU reductions (M=1 MXU matmul avoided).
        hid = jnp.maximum(
            jnp.sum(wse1_ref[...] * pooled, axis=1, keepdims=True), 0.0)
        z = jnp.sum(wse2_ref[...] * hid, axis=0, keepdims=True)      # (1, exp)
        gate = pl.reciprocal(1.0 + jnp.exp(-z), approx=True)         # sigmoid
        y2 = y2 * gate

    y2 = jnp.maximum(y2, 0.0)                                        # ReLU

    out = jnp.dot(y2.astype(jnp.bfloat16), w2_ref[...],
                  preferred_element_type=jnp.float32)
    out = out * sb2_ref[0:1, :] + sb2_ref[1:2, :]

    if use_res:  # residual in f32 (re-read x to keep its live range short)
        out = out + x_ref[0].astype(jnp.float32).reshape(H * W, inp)

    o_ref[...] = out.reshape(1, Ho, Wo, oup).astype(o_ref.dtype)


def inverted_residual(x_nchw, params, *, kernel_size, stride, se):
    """Fused MobileNetV3 InvertedResidual forward (eval mode, BN folded)."""
    assert stride in (1, 2) and kernel_size in (3, 5)
    N, inp, H, W = x_nchw.shape
    has_expand = "w1" in params
    exp = params["wd"].shape[-1]
    oup = params["w2"].shape[-1]
    use_res = (stride == 1 and inp == oup)
    k, s = kernel_size, stride
    p = (k - 1) // 2
    Ho = (H + 2 * p - k) // s + 1
    Wo = (W + 2 * p - k) // s + 1
    Hp = (Ho - 1) * s + k                      # padded rows actually read
    Wc = _round_up(_LEFT + W + 8, 8)           # aligned left halo + right halo

    x_nhwc = jnp.transpose(x_nchw, (0, 2, 3, 1))   # channels -> lane axis

    proc = dict(params)
    if has_expand:                                 # bf16 operands for the MXU
        proc["w1"] = params["w1"].astype(jnp.bfloat16)
    proc["w2"] = params["w2"].astype(jnp.bfloat16)

    operands = [x_nhwc]
    in_specs = [pl.BlockSpec((1, H, W, inp), lambda n: (n, 0, 0, 0))]

    def _full(arr):  # whole-array block, broadcast across the batch grid
        return pl.BlockSpec(arr.shape, lambda n, _nd=arr.ndim: (0,) * _nd)

    names = (["w1", "sb1"] if has_expand else []) + ["wd", "sbd"] \
        + (["wse1", "wse2"] if se else []) + ["w2", "sb2"]
    for name in names:
        operands.append(proc[name])
        in_specs.append(_full(proc[name]))

    kernel = functools.partial(
        _ir_kernel, inp=inp, oup=oup, k=k, s=s, exp=exp, se=se, H=H, W=W,
        Ho=Ho, Wo=Wo, p=p, Hp=Hp, Wc=Wc, has_expand=has_expand,
        use_res=use_res)

    # VMEM budget: scratch + double-buffered blocks/weights (+ slack), clamped
    # to stay legal across v5e (16 MiB scoped default) .. v7x (64 MiB phys).
    scratch_bytes = (Hp * Wc * exp + Ho * Wo * exp) * 4
    w_bytes = sum(int(proc[n].size) * proc[n].dtype.itemsize for n in names)
    blk_bytes = (H * W * inp + Ho * Wo * oup) * x_nchw.dtype.itemsize
    need = scratch_bytes + 2 * (w_bytes + blk_bytes) + (8 << 20)
    vmem_limit = int(min(60 << 20, max(32 << 20, need)))

    out_nhwc = pl.pallas_call(
        kernel,
        out_shape=jax.ShapeDtypeStruct((N, Ho, Wo, oup), x_nchw.dtype),
        grid=(N,),
        in_specs=in_specs,
        out_specs=pl.BlockSpec((1, Ho, Wo, oup), lambda n: (n, 0, 0, 0)),
        scratch_shapes=[pltpu.VMEM((Hp, Wc, exp), jnp.float32),
                        pltpu.VMEM((Ho * Wo, exp), jnp.float32)],
        compiler_params=pltpu.CompilerParams(
            dimension_semantics=("parallel",),
            vmem_limit_bytes=vmem_limit),
    )(*operands)

    return jnp.transpose(out_nhwc, (0, 3, 1, 2))   # back to NCHW


# ---------------- pure-JAX reference (for correctness check) ----------------
def inverted_residual_ref(x_nchw, params, *, kernel_size, stride, se):
    P = jax.lax.Precision.HIGHEST
    # Mirror the kernel's intentional bf16 operand rounding of the two MXU
    # 1x1 convs (f32 accumulation); everything else stays f32.
    b16 = lambda t: t.astype(jnp.bfloat16).astype(jnp.float32)
    x = jnp.transpose(x_nchw, (0, 2, 3, 1)).astype(jnp.float32)   # NHWC
    N, H, W, Cin = x.shape
    oup = params["w2"].shape[-1]
    use_res = (stride == 1 and Cin == oup)
    h = x
    if "w1" in params:
        h = jnp.einsum("nhwc,ce->nhwe", b16(x), b16(params["w1"]), precision=P)
        h = h * params["sb1"][0] + params["sb1"][1]
        h = jnp.maximum(h, 0.0)
    exp = h.shape[-1]
    k, s = kernel_size, stride
    p = (k - 1) // 2
    Ho = (H + 2 * p - k) // s + 1
    Wo = (W + 2 * p - k) // s + 1
    hp = jnp.pad(h, ((0, 0), (p, p), (p, p), (0, 0)))
    acc = jnp.zeros((N, Ho, Wo, exp), jnp.float32)
    for i in range(k):
        for j in range(k):
            win = hp[:, i:i + s * (Ho - 1) + 1:s, j:j + s * (Wo - 1) + 1:s, :]
            acc = acc + win * params["wd"][i, j]
    y = acc * params["sbd"][0] + params["sbd"][1]
    if se:
        pooled = jnp.mean(y, axis=(1, 2), keepdims=True)
        hid = jnp.maximum(
            jnp.einsum("nijc,rc->nijr", pooled, params["wse1"], precision=P), 0.0)
        z = jnp.einsum("nijr,rc->nijc", hid, params["wse2"], precision=P)
        y = y * jax.nn.sigmoid(z)
    y = jnp.maximum(y, 0.0)
    out = jnp.einsum("nhwc,co->nhwo", b16(y), b16(params["w2"]), precision=P)
    out = out * params["sb2"][0] + params["sb2"][1]
    if use_res:
        out = out + x
    return jnp.transpose(out, (0, 3, 1, 2)).astype(x_nchw.dtype)


def fold_bn(key, c, eps=1e-5):
    """Random eval-mode BatchNorm folded to (scale, bias): y = x*scale + bias."""
    k1, k2, k3, k4 = jax.random.split(key, 4)
    gamma = 1.0 + 0.1 * jax.random.normal(k1, (c,), jnp.float32)
    beta = 0.1 * jax.random.normal(k2, (c,), jnp.float32)
    mean = 0.1 * jax.random.normal(k3, (c,), jnp.float32)
    var = jnp.abs(1.0 + 0.1 * jax.random.normal(k4, (c,), jnp.float32))
    scale = gamma / jnp.sqrt(var + eps)
    bias = beta - mean * scale
    return jnp.stack([scale, bias], axis=0)        # (2, c)


if __name__ == "__main__":
    key = jax.random.PRNGKey(0)
    # InvertedResidual(inp=16, oup=16, kernel=3, stride=1, exp=64, se=True)
    N, Cin, H, W = 2, 16, 16, 16
    oup, exp, ksz, stride, se = 16, 64, 3, 1, True

    ks = jax.random.split(key, 9)
    params = {
        # PyTorch Conv2d(inp, exp, 1).weight (exp, inp, 1, 1) -> stored (inp, exp)
        "w1": jax.random.normal(ks[0], (Cin, exp), jnp.float32) * (Cin ** -0.5),
        "sb1": fold_bn(ks[1], exp),
        # depthwise Conv2d(exp, exp, k, groups=exp).weight (exp, 1, k, k) -> (k, k, exp)
        "wd": jax.random.normal(ks[2], (ksz, ksz, exp), jnp.float32) * (1.0 / ksz),
        "sbd": fold_bn(ks[3], exp),
        # SE: Conv2d(exp, exp//4, 1).weight -> stored (exp//4, exp) [out, in]
        #     Conv2d(exp//4, exp, 1).weight -> stored (exp//4, exp) [in, out]
        "wse1": jax.random.normal(ks[4], (exp // 4, exp), jnp.float32) * (exp ** -0.5),
        "wse2": jax.random.normal(ks[5], (exp // 4, exp), jnp.float32) * ((exp // 4) ** -0.5),
        # project Conv2d(exp, oup, 1).weight (oup, exp, 1, 1) -> stored (exp, oup)
        "w2": jax.random.normal(ks[6], (exp, oup), jnp.float32) * (exp ** -0.5),
        "sb2": fold_bn(ks[7], oup),
    }
    x = jax.random.normal(ks[8], (N, Cin, H, W), jnp.float32)

    y = inverted_residual(x, params, kernel_size=ksz, stride=stride, se=se)
    jax.block_until_ready(y)

    y_ref = inverted_residual_ref(x, params, kernel_size=ksz, stride=stride, se=se)
    assert y.shape == (N, oup, H, W) and y.dtype == x.dtype
    err = float(jnp.max(jnp.abs(y - y_ref)))
    assert bool(jnp.allclose(y, y_ref, atol=2e-2, rtol=2e-2)), err
    print("KERNEL_OK")
</pallas_src>

<mosaic_0001>
module attributes {stable_mosaic.version = 11 : i64} {
  func.func @_ir_kernel(%arg0: i32, %arg1: memref<1x16x16x16xf32, #tpu.memory_space<vmem>>, %arg2: memref<16x64xbf16, #tpu.memory_space<vmem>>, %arg3: memref<2x64xf32, #tpu.memory_space<vmem>>, %arg4: memref<3x3x64xf32, #tpu.memory_space<vmem>>, %arg5: memref<2x64xf32, #tpu.memory_space<vmem>>, %arg6: memref<16x64xf32, #tpu.memory_space<vmem>>, %arg7: memref<16x64xf32, #tpu.memory_space<vmem>>, %arg8: memref<64x16xbf16, #tpu.memory_space<vmem>>, %arg9: memref<2x16xf32, #tpu.memory_space<vmem>>, %arg10: memref<1x16x16x16xf32, #tpu.memory_space<vmem>>, %arg11: memref<18x32x64xf32, #tpu.memory_space<vmem>>, %arg12: memref<256x64xf32, #tpu.memory_space<vmem>>) attributes {dimension_semantics = [#tpu.dimension_semantics<parallel>], iteration_bounds = array<i64: 2>, scalar_prefetch = 0 : i64, scratch_operands = 2 : i64, tpu.core_type = #tpu.core_type<tc>, window_params = [{transform_indices = @transform_0, window_bounds = array<i64: 1, 16, 16, 16>}, {pipeline_mode = #tpu.pipeline_mode<synchronous>, transform_indices = @transform_1, window_bounds = array<i64: 16, 64>}, {pipeline_mode = #tpu.pipeline_mode<synchronous>, transform_indices = @transform_2, window_bounds = array<i64: 2, 64>}, {pipeline_mode = #tpu.pipeline_mode<synchronous>, transform_indices = @transform_3, window_bounds = array<i64: 3, 3, 64>}, {pipeline_mode = #tpu.pipeline_mode<synchronous>, transform_indices = @transform_4, window_bounds = array<i64: 2, 64>}, {pipeline_mode = #tpu.pipeline_mode<synchronous>, transform_indices = @transform_5, window_bounds = array<i64: 16, 64>}, {pipeline_mode = #tpu.pipeline_mode<synchronous>, transform_indices = @transform_6, window_bounds = array<i64: 16, 64>}, {pipeline_mode = #tpu.pipeline_mode<synchronous>, transform_indices = @transform_7, window_bounds = array<i64: 64, 16>}, {pipeline_mode = #tpu.pipeline_mode<synchronous>, transform_indices = @transform_8, window_bounds = array<i64: 2, 16>}, {transform_indices = @transform_9, window_bounds = array<i64: 1, 16, 16, 16>}]} {
    %c0 = arith.constant 0 : index
    %c0_0 = arith.constant 0 : index
    %c0_1 = arith.constant 0 : index
    %c0_2 = arith.constant 0 : index
    %0 = vector.load %arg1[%c0, %c0_0, %c0_1, %c0_2] : memref<1x16x16x16xf32, #tpu.memory_space<vmem>>, vector<1x16x16x16xf32>
    %1 = vector.shape_cast %0 : vector<1x16x16x16xf32> to vector<16x16x16xf32>
    %2 = vector.shape_cast %1 : vector<16x16x16xf32> to vector<256x16xf32>
    %3 = arith.truncf %2 : vector<256x16xf32> to vector<256x16xbf16>
    %c0_3 = arith.constant 0 : index
    %c0_4 = arith.constant 0 : index
    %4 = vector.load %arg2[%c0_3, %c0_4] : memref<16x64xbf16, #tpu.memory_space<vmem>>, vector<16x64xbf16>
    %cst = arith.constant dense<0.000000e+00> : vector<256x64xf32>
    %5 = tpu.matmul %3, %4, %cst {dimension_numbers = #tpu.dot_dimension_numbers<[1], [0], [0], [1], [0, 0, 1, 1], [], []>} : vector<256x16xbf16>, vector<16x64xbf16>, vector<256x64xf32> -> vector<256x64xf32>
    %c0_5 = arith.constant 0 : index
    %c0_6 = arith.constant 0 : index
    %6 = vector.load %arg3[%c0_5, %c0_6] : memref<2x64xf32, #tpu.memory_space<vmem>>, vector<1x64xf32>
    %7 = vector.broadcast %6 : vector<1x64xf32> to vector<256x64xf32>
    %8 = arith.mulf %5, %7 : vector<256x64xf32>
    %c1 = arith.constant 1 : index
    %c0_7 = arith.constant 0 : index
    %9 = vector.load %arg3[%c1, %c0_7] : memref<2x64xf32, #tpu.memory_space<vmem>>, vector<1x64xf32>
    %10 = vector.broadcast %9 : vector<1x64xf32> to vector<256x64xf32>
    %11 = arith.addf %8, %10 : vector<256x64xf32>
    %cst_8 = arith.constant 0.000000e+00 : f32
    %12 = vector.broadcast %cst_8 : f32 to vector<256x64xf32>
    %13 = arith.maximumf %11, %12 : vector<256x64xf32>
    %cst_9 = arith.constant 0.000000e+00 : f32
    %14 = vector.broadcast %cst_9 : f32 to vector<18x8x64xf32>
    %c0_10 = arith.constant 0 : index
    %c0_11 = arith.constant 0 : index
    %c0_12 = arith.constant 0 : index
    %15 = vector.load %arg11[%c0_10, %c0_11, %c0_12] : memref<18x32x64xf32, #tpu.memory_space<vmem>>, vector<18x8x64xf32>
    tpu.vector_store %arg11[%c0_10, %c0_11, %c0_12], %14 {strides = array<i32>} : memref<18x32x64xf32, #tpu.memory_space<vmem>>, vector<18x8x64xf32>,
    %cst_13 = arith.constant 0.000000e+00 : f32
    %16 = vector.broadcast %cst_13 : f32 to vector<18x8x64xf32>
    %c0_14 = arith.constant 0 : index
    %c24 = arith.constant 24 : index
    %c0_15 = arith.constant 0 : index
    %17 = vector.load %arg11[%c0_14, %c24, %c0_15] : memref<18x32x64xf32, #tpu.memory_space<vmem>>, vector<18x8x64xf32>
    tpu.vector_store %arg11[%c0_14, %c24, %c0_15], %16 {strides = array<i32>} : memref<18x32x64xf32, #tpu.memory_space<vmem>>, vector<18x8x64xf32>,
    %cst_16 = arith.constant 0.000000e+00 : f32
    %18 = vector.broadcast %cst_16 : f32 to vector<1x16x64xf32>
    %c0_17 = arith.constant 0 : index
    %c8 = arith.constant 8 : index
    %c0_18 = arith.constant 0 : index
    %19 = vector.load %arg11[%c0_17, %c8, %c0_18] : memref<18x32x64xf32, #tpu.memory_space<vmem>>, vector<1x16x64xf32>
    tpu.vector_store %arg11[%c0_17, %c8, %c0_18], %18 {strides = array<i32>} : memref<18x32x64xf32, #tpu.memory_space<vmem>>, vector<1x16x64xf32>,
    %cst_19 = arith.constant 0.000000e+00 : f32
    %20 = vector.broadcast %cst_19 : f32 to vector<1x16x64xf32>
    %c17 = arith.constant 17 : index
    %c8_20 = arith.constant 8 : index
    %c0_21 = arith.constant 0 : index
    %21 = vector.load %arg11[%c17, %c8_20, %c0_21] : memref<18x32x64xf32, #tpu.memory_space<vmem>>, vector<1x16x64xf32>
    tpu.vector_store %arg11[%c17, %c8_20, %c0_21], %20 {strides = array<i32>} : memref<18x32x64xf32, #tpu.memory_space<vmem>>, vector<1x16x64xf32>,
    %22 = vector.shape_cast %13 : vector<256x64xf32> to vector<16x16x64xf32>
    %c1_22 = arith.constant 1 : index
    %c8_23 = arith.constant 8 : index
    %c0_24 = arith.constant 0 : index
    %23 = vector.load %arg11[%c1_22, %c8_23, %c0_24] : memref<18x32x64xf32, #tpu.memory_space<vmem>>, vector<16x16x64xf32>
    tpu.vector_store %arg11[%c1_22, %c8_23, %c0_24], %22 {strides = array<i32>} : memref<18x32x64xf32, #tpu.memory_space<vmem>>, vector<16x16x64xf32>,
    %c0_25 = arith.constant 0 : index
    %c0_26 = arith.constant 0 : index
    %c0_27 = arith.constant 0 : index
    %24 = vector.load %arg4[%c0_25, %c0_26, %c0_27] : memref<3x3x64xf32, #tpu.memory_space<vmem>>, vector<3x3x64xf32>
    %cst_28 = arith.constant 0.000000e+00 : f32
    %25 = vector.broadcast %cst_28 : f32 to vector<8x16x64xf32>
    %c0_29 = arith.constant 0 : index
    %c0_30 = arith.constant 0 : index
    %c0_31 = arith.constant 0 : index
    %26 = vector.load %arg11[%c0_29, %c0_30, %c0_31] : memref<18x32x64xf32, #tpu.memory_space<vmem>>, vector<10x32x64xf32>
    %27 = vector.shape_cast %26 : vector<10x32x64xf32> to vector<320x64xf32>
    %c313_i32 = arith.constant 313 : i32
    %28 = tpu.dynamic_rotate %27 by %c313_i32 dim 0 : vector<320x64xf32>, i32 -> vector<320x64xf32>
    %29 = vector.shape_cast %28 : vector<320x64xf32> to vector<10x32x64xf32>
    %30 = vector.extract_strided_slice %29 {offsets = [0, 0, 0], sizes = [8, 16, 64], strides = [1, 1, 1]} : vector<10x32x64xf32> to vector<8x16x64xf32>
    %31 = vector.extract_strided_slice %24 {offsets = [0, 0, 0], sizes = [1, 1, 64], strides = [1, 1, 1]} : vector<3x3x64xf32> to vector<1x1x64xf32>
    %32 = vector.broadcast %31 : vector<1x1x64xf32> to vector<8x16x64xf32>
    %33 = arith.mulf %30, %32 : vector<8x16x64xf32>
    %34 = arith.addf %25, %33 : vector<8x16x64xf32>
    %35 = vector.extract_strided_slice %29 {offsets = [1, 0, 0], sizes = [8, 16, 64], strides = [1, 1, 1]} : vector<10x32x64xf32> to vector<8x16x64xf32>
    %36 = vector.extract_strided_slice %24 {offsets = [1, 0, 0], sizes = [1, 1, 64], strides = [1, 1, 1]} : vector<3x3x64xf32> to vector<1x1x64xf32>
    %37 = vector.broadcast %36 : vector<1x1x64xf32> to vector<8x16x64xf32>
    %38 = arith.mulf %35, %37 : vector<8x16x64xf32>
    %39 = arith.addf %34, %38 : vector<8x16x64xf32>
    %40 = vector.extract_strided_slice %29 {offsets = [2, 0, 0], sizes = [8, 16, 64], strides = [1, 1, 1]} : vector<10x32x64xf32> to vector<8x16x64xf32>
    %41 = vector.extract_strided_slice %24 {offsets = [2, 0, 0], sizes = [1, 1, 64], strides = [1, 1, 1]} : vector<3x3x64xf32> to vector<1x1x64xf32>
    %42 = vector.broadcast %41 : vector<1x1x64xf32> to vector<8x16x64xf32>
    %43 = arith.mulf %40, %42 : vector<8x16x64xf32>
    %44 = arith.addf %39, %43 : vector<8x16x64xf32>
    %c312_i32 = arith.constant 312 : i32
    %45 = tpu.dynamic_rotate %27 by %c312_i32 dim 0 : vector<320x64xf32>, i32 -> vector<320x64xf32>
    %46 = vector.shape_cast %45 : vector<320x64xf32> to vector<10x32x64xf32>
    %47 = vector.extract_strided_slice %46 {offsets = [0, 0, 0], sizes = [8, 16, 64], strides = [1, 1, 1]} : vector<10x32x64xf32> to vector<8x16x64xf32>
    %48 = vector.extract_strided_slice %24 {offsets = [0, 1, 0], sizes = [1, 1, 64], strides = [1, 1, 1]} : vector<3x3x64xf32> to vector<1x1x64xf32>
    %49 = vector.broadcast %48 : vector<1x1x64xf32> to vector<8x16x64xf32>
    %50 = arith.mulf %47, %49 : vector<8x16x64xf32>
    %51 = arith.addf %44, %50 : vector<8x16x64xf32>
    %52 = vector.extract_strided_slice %46 {offsets = [1, 0, 0], sizes = [8, 16, 64], strides = [1, 1, 1]} : vector<10x32x64xf32> to vector<8x16x64xf32>
    %53 = vector.extract_strided_slice %24 {offsets = [1, 1, 0], sizes = [1, 1, 64], strides = [1, 1, 1]} : vector<3x3x64xf32> to vector<1x1x64xf32>
    %54 = vector.broadcast %53 : vector<1x1x64xf32> to vector<8x16x64xf32>
    %55 = arith.mulf %52, %54 : vector<8x16x64xf32>
    %56 = arith.addf %51, %55 : vector<8x16x64xf32>
    %57 = vector.extract_strided_slice %46 {offsets = [2, 0, 0], sizes = [8, 16, 64], strides = [1, 1, 1]} : vector<10x32x64xf32> to vector<8x16x64xf32>
    %58 = vector.extract_strided_slice %24 {offsets = [2, 1, 0], sizes = [1, 1, 64], strides = [1, 1, 1]} : vector<3x3x64xf32> to vector<1x1x64xf32>
    %59 = vector.broadcast %58 : vector<1x1x64xf32> to vector<8x16x64xf32>
    %60 = arith.mulf %57, %59 : vector<8x16x64xf32>
    %61 = arith.addf %56, %60 : vector<8x16x64xf32>
    %c311_i32 = arith.constant 311 : i32
    %62 = tpu.dynamic_rotate %27 by %c311_i32 dim 0 : vector<320x64xf32>, i32 -> vector<320x64xf32>
    %63 = vector.shape_cast %62 : vector<320x64xf32> to vector<10x32x64xf32>
    %64 = vector.extract_strided_slice %63 {offsets = [0, 0, 0], sizes = [8, 16, 64], strides = [1, 1, 1]} : vector<10x32x64xf32> to vector<8x16x64xf32>
    %65 = vector.extract_strided_slice %24 {offsets = [0, 2, 0], sizes = [1, 1, 64], strides = [1, 1, 1]} : vector<3x3x64xf32> to vector<1x1x64xf32>
    %66 = vector.broadcast %65 : vector<1x1x64xf32> to vector<8x16x64xf32>
    %67 = arith.mulf %64, %66 : vector<8x16x64xf32>
    %68 = arith.addf %61, %67 : vector<8x16x64xf32>
    %69 = vector.extract_strided_slice %63 {offsets = [1, 0, 0], sizes = [8, 16, 64], strides = [1, 1, 1]} : vector<10x32x64xf32> to vector<8x16x64xf32>
    %70 = vector.extract_strided_slice %24 {offsets = [1, 2, 0], sizes = [1, 1, 64], strides = [1, 1, 1]} : vector<3x3x64xf32> to vector<1x1x64xf32>
    %71 = vector.broadcast %70 : vector<1x1x64xf32> to vector<8x16x64xf32>
    %72 = arith.mulf %69, %71 : vector<8x16x64xf32>
    %73 = arith.addf %68, %72 : vector<8x16x64xf32>
    %74 = vector.extract_strided_slice %63 {offsets = [2, 0, 0], sizes = [8, 16, 64], strides = [1, 1, 1]} : vector<10x32x64xf32> to vector<8x16x64xf32>
    %75 = vector.extract_strided_slice %24 {offsets = [2, 2, 0], sizes = [1, 1, 64], strides = [1, 1, 1]} : vector<3x3x64xf32> to vector<1x1x64xf32>
    %76 = vector.broadcast %75 : vector<1x1x64xf32> to vector<8x16x64xf32>
    %77 = arith.mulf %74, %76 : vector<8x16x64xf32>
    %78 = arith.addf %73, %77 : vector<8x16x64xf32>
    %79 = vector.shape_cast %78 : vector<8x16x64xf32> to vector<128x64xf32>
    %c0_32 = arith.constant 0 : index
    %c0_33 = arith.constant 0 : index
    %80 = vector.load %arg12[%c0_32, %c0_33] : memref<256x64xf32, #tpu.memory_space<vmem>>, vector<128x64xf32>
    tpu.vector_store %arg12[%c0_32, %c0_33], %79 {strides = array<i32>} : memref<256x64xf32, #tpu.memory_space<vmem>>, vector<128x64xf32>,
    %cst_34 = arith.constant 0.000000e+00 : f32
    %81 = vector.broadcast %cst_34 : f32 to vector<8x16x64xf32>
    %c8_35 = arith.constant 8 : index
    %c0_36 = arith.constant 0 : index
    %c0_37 = arith.constant 0 : index
    %82 = vector.load %arg11[%c8_35, %c0_36, %c0_37] : memref<18x32x64xf32, #tpu.memory_space<vmem>>, vector<10x32x64xf32>
    %83 = vector.shape_cast %82 : vector<10x32x64xf32> to vector<320x64xf32>
    %c313_i32_38 = arith.constant 313 : i32
    %84 = tpu.dynamic_rotate %83 by %c313_i32_38 dim 0 : vector<320x64xf32>, i32 -> vector<320x64xf32>
    %85 = vector.shape_cast %84 : vector<320x64xf32> to vector<10x32x64xf32>
    %86 = vector.extract_strided_slice %85 {offsets = [0, 0, 0], sizes = [8, 16, 64], strides = [1, 1, 1]} : vector<10x32x64xf32> to vector<8x16x64xf32>
    %87 = vector.extract_strided_slice %24 {offsets = [0, 0, 0], sizes = [1, 1, 64], strides = [1, 1, 1]} : vector<3x3x64xf32> to vector<1x1x64xf32>
    %88 = vector.broadcast %87 : vector<1x1x64xf32> to vector<8x16x64xf32>
    %89 = arith.mulf %86, %88 : vector<8x16x64xf32>
    %90 = arith.addf %81, %89 : vector<8x16x64xf32>
    %91 = vector.extract_strided_slice %85 {offsets = [1, 0, 0], sizes = [8, 16, 64], strides = [1, 1, 1]} : vector<10x32x64xf32> to vector<8x16x64xf32>
    %92 = vector.extract_strided_slice %24 {offsets = [1, 0, 0], sizes = [1, 1, 64], strides = [1, 1, 1]} : vector<3x3x64xf32> to vector<1x1x64xf32>
    %93 = vector.broadcast %92 : vector<1x1x64xf32> to vector<8x16x64xf32>
    %94 = arith.mulf %91, %93 : vector<8x16x64xf32>
    %95 = arith.addf %90, %94 : vector<8x16x64xf32>
    %96 = vector.extract_strided_slice %85 {offsets = [2, 0, 0], sizes = [8, 16, 64], strides = [1, 1, 1]} : vector<10x32x64xf32> to vector<8x16x64xf32>
    %97 = vector.extract_strided_slice %24 {offsets = [2, 0, 0], sizes = [1, 1, 64], strides = [1, 1, 1]} : vector<3x3x64xf32> to vector<1x1x64xf32>
    %98 = vector.broadcast %97 : vector<1x1x64xf32> to vector<8x16x64xf32>
    %99 = arith.mulf %96, %98 : vector<8x16x64xf32>
    %100 = arith.addf %95, %99 : vector<8x16x64xf32>
    %c312_i32_39 = arith.constant 312 : i32
    %101 = tpu.dynamic_rotate %83 by %c312_i32_39 dim 0 : vector<320x64xf32>, i32 -> vector<320x64xf32>
    %102 = vector.shape_cast %101 : vector<320x64xf32> to vector<10x32x64xf32>
    %103 = vector.extract_strided_slice %102 {offsets = [0, 0, 0], sizes = [8, 16, 64], strides = [1, 1, 1]} : vector<10x32x64xf32> to vector<8x16x64xf32>
    %104 = vector.extract_strided_slice %24 {offsets = [0, 1, 0], sizes = [1, 1, 64], strides = [1, 1, 1]} : vector<3x3x64xf32> to vector<1x1x64xf32>
    %105 = vector.broadcast %104 : vector<1x1x64xf32> to vector<8x16x64xf32>
    %106 = arith.mulf %103, %105 : vector<8x16x64xf32>
    %107 = arith.addf %100, %106 : vector<8x16x64xf32>
    %108 = vector.extract_strided_slice %102 {offsets = [1, 0, 0], sizes = [8, 16, 64], strides = [1, 1, 1]} : vector<10x32x64xf32> to vector<8x16x64xf32>
    %109 = vector.extract_strided_slice %24 {offsets = [1, 1, 0], sizes = [1, 1, 64], strides = [1, 1, 1]} : vector<3x3x64xf32> to vector<1x1x64xf32>
    %110 = vector.broadcast %109 : vector<1x1x64xf32> to vector<8x16x64xf32>
    %111 = arith.mulf %108, %110 : vector<8x16x64xf32>
    %112 = arith.addf %107, %111 : vector<8x16x64xf32>
    %113 = vector.extract_strided_slice %102 {offsets = [2, 0, 0], sizes = [8, 16, 64], strides = [1, 1, 1]} : vector<10x32x64xf32> to vector<8x16x64xf32>
    %114 = vector.extract_strided_slice %24 {offsets = [2, 1, 0], sizes = [1, 1, 64], strides = [1, 1, 1]} : vector<3x3x64xf32> to vector<1x1x64xf32>
    %115 = vector.broadcast %114 : vector<1x1x64xf32> to vector<8x16x64xf32>
    %116 = arith.mulf %113, %115 : vector<8x16x64xf32>
    %117 = arith.addf %112, %116 : vector<8x16x64xf32>
    %c311_i32_40 = arith.constant 311 : i32
    %118 = tpu.dynamic_rotate %83 by %c311_i32_40 dim 0 : vector<320x64xf32>, i32 -> vector<320x64xf32>
    %119 = vector.shape_cast %118 : vector<320x64xf32> to vector<10x32x64xf32>
    %120 = vector.extract_strided_slice %119 {offsets = [0, 0, 0], sizes = [8, 16, 64], strides = [1, 1, 1]} : vector<10x32x64xf32> to vector<8x16x64xf32>
    %121 = vector.extract_strided_slice %24 {offsets = [0, 2, 0], sizes = [1, 1, 64], strides = [1, 1, 1]} : vector<3x3x64xf32> to vector<1x1x64xf32>
    %122 = vector.broadcast %121 : vector<1x1x64xf32> to vector<8x16x64xf32>
    %123 = arith.mulf %120, %122 : vector<8x16x64xf32>
    %124 = arith.addf %117, %123 : vector<8x16x64xf32>
    %125 = vector.extract_strided_slice %119 {offsets = [1, 0, 0], sizes = [8, 16, 64], strides = [1, 1, 1]} : vector<10x32x64xf32> to vector<8x16x64xf32>
    %126 = vector.extract_strided_slice %24 {offsets = [1, 2, 0], sizes = [1, 1, 64], strides = [1, 1, 1]} : vector<3x3x64xf32> to vector<1x1x64xf32>
    %127 = vector.broadcast %126 : vector<1x1x64xf32> to vector<8x16x64xf32>
    %128 = arith.mulf %125, %127 : vector<8x16x64xf32>
    %129 = arith.addf %124, %128 : vector<8x16x64xf32>
    %130 = vector.extract_strided_slice %119 {offsets = [2, 0, 0], sizes = [8, 16, 64], strides = [1, 1, 1]} : vector<10x32x64xf32> to vector<8x16x64xf32>
    %131 = vector.extract_strided_slice %24 {offsets = [2, 2, 0], sizes = [1, 1, 64], strides = [1, 1, 1]} : vector<3x3x64xf32> to vector<1x1x64xf32>
    %132 = vector.broadcast %131 : vector<1x1x64xf32> to vector<8x16x64xf32>
    %133 = arith.mulf %130, %132 : vector<8x16x64xf32>
    %134 = arith.addf %129, %133 : vector<8x16x64xf32>
    %135 = vector.shape_cast %134 : vector<8x16x64xf32> to vector<128x64xf32>
    %c128 = arith.constant 128 : index
    %c0_41 = arith.constant 0 : index
    %136 = vector.load %arg12[%c128, %c0_41] : memref<256x64xf32, #tpu.memory_space<vmem>>, vector<128x64xf32>
    tpu.vector_store %arg12[%c128, %c0_41], %135 {strides = array<i32>} : memref<256x64xf32, #tpu.memory_space<vmem>>, vector<128x64xf32>,
    %c0_42 = arith.constant 0 : index
    %c0_43 = arith.constant 0 : index
    %137 = vector.load %arg12[%c0_42, %c0_43] : memref<256x64xf32, #tpu.memory_space<vmem>>, vector<256x64xf32>
    %c0_44 = arith.constant 0 : index
    %c0_45 = arith.constant 0 : index
    %138 = vector.load %arg5[%c0_44, %c0_45] : memref<2x64xf32, #tpu.memory_space<vmem>>, vector<1x64xf32>
    %139 = vector.broadcast %138 : vector<1x64xf32> to vector<256x64xf32>
    %140 = arith.mulf %137, %139 : vector<256x64xf32>
    %c1_46 = arith.constant 1 : index
    %c0_47 = arith.constant 0 : index
    %141 = vector.load %arg5[%c1_46, %c0_47] : memref<2x64xf32, #tpu.memory_space<vmem>>, vector<1x64xf32>
    %142 = vector.broadcast %141 : vector<1x64xf32> to vector<256x64xf32>
    %143 = arith.addf %140, %142 : vector<256x64xf32>
    %cst_48 = arith.constant dense<0.000000e+00> : vector<64xf32>
    %144 = vector.multi_reduction <add>, %143, %cst_48 [0] : vector<256x64xf32> to vector<64xf32>
    %145 = vector.shape_cast %144 : vector<64xf32> to vector<1x64xf32>
    %cst_49 = arith.constant 2.560000e+02 : f32
    %146 = vector.broadcast %cst_49 : f32 to vector<1x64xf32>
    %147 = arith.divf %145, %146 : vector<1x64xf32>
    %c0_50 = arith.constant 0 : index
    %c0_51 = arith.constant 0 : index
    %148 = vector.load %arg6[%c0_50, %c0_51] : memref<16x64xf32, #tpu.memory_space<vmem>>, vector<16x64xf32>
    %149 = vector.broadcast %147 : vector<1x64xf32> to vector<16x64xf32>
    %150 = arith.mulf %148, %149 : vector<16x64xf32>
    %cst_52 = arith.constant dense<0.000000e+00> : vector<16xf32>
    %151 = vector.multi_reduction <add>, %150, %cst_52 [1] : vector<16x64xf32> to vector<16xf32>
    %152 = vector.shape_cast %151 : vector<16xf32> to vector<16x1xf32>
    %cst_53 = arith.constant 0.000000e+00 : f32
    %153 = vector.broadcast %cst_53 : f32 to vector<16x1xf32>
    %154 = arith.maximumf %152, %153 : vector<16x1xf32>
    %c0_54 = arith.constant 0 : index
    %c0_55 = arith.constant 0 : index
    %155 = vector.load %arg7[%c0_54, %c0_55] : memref<16x64xf32, #tpu.memory_space<vmem>>, vector<16x64xf32>
    %156 = vector.broadcast %154 : vector<16x1xf32> to vector<16x64xf32>
    %157 = arith.mulf %155, %156 : vector<16x64xf32>
    %cst_56 = arith.constant dense<0.000000e+00> : vector<64xf32>
    %158 = vector.multi_reduction <add>, %157, %cst_56 [0] : vector<16x64xf32> to vector<64xf32>
    %159 = vector.shape_cast %158 : vector<64xf32> to vector<1x64xf32>
    %cst_57 = arith.constant 0.000000e+00 : f32
    %160 = vector.broadcast %cst_57 : f32 to vector<1x64xf32>
    %161 = arith.subf %160, %159 : vector<1x64xf32>
    %162 = math.exp %161 : vector<1x64xf32>
    %cst_58 = arith.constant 1.000000e+00 : f32
    %163 = vector.broadcast %cst_58 : f32 to vector<1x64xf32>
    %164 = arith.addf %163, %162 : vector<1x64xf32>
    %165 = tpu.reciprocal %164 {approx = true} : vector<1x64xf32> -> vector<1x64xf32>
    %166 = vector.broadcast %165 : vector<1x64xf32> to vector<256x64xf32>
    %167 = arith.mulf %143, %166 : vector<256x64xf32>
    %cst_59 = arith.constant 0.000000e+00 : f32
    %168 = vector.broadcast %cst_59 : f32 to vector<256x64xf32>
    %169 = arith.maximumf %167, %168 : vector<256x64xf32>
    %170 = arith.truncf %169 : vector<256x64xf32> to vector<256x64xbf16>
    %c0_60 = arith.constant 0 : index
    %c0_61 = arith.constant 0 : index
    %171 = vector.load %arg8[%c0_60, %c0_61] : memref<64x16xbf16, #tpu.memory_space<vmem>>, vector<64x16xbf16>
    %cst_62 = arith.constant dense<0.000000e+00> : vector<256x16xf32>
    %172 = tpu.matmul %170, %171, %cst_62 {dimension_numbers = #tpu.dot_dimension_numbers<[1], [0], [0], [1], [0, 0, 1, 1], [], []>} : vector<256x64xbf16>, vector<64x16xbf16>, vector<256x16xf32> -> vector<256x16xf32>
    %c0_63 = arith.constant 0 : index
    %c0_64 = arith.constant 0 : index
    %173 = vector.load %arg9[%c0_63, %c0_64] : memref<2x16xf32, #tpu.memory_space<vmem>>, vector<1x16xf32>
    %174 = vector.broadcast %173 : vector<1x16xf32> to vector<256x16xf32>
    %175 = arith.mulf %172, %174 : vector<256x16xf32>
    %c1_65 = arith.constant 1 : index
    %c0_66 = arith.constant 0 : index
    %176 = vector.load %arg9[%c1_65, %c0_66] : memref<2x16xf32, #tpu.memory_space<vmem>>, vector<1x16xf32>
    %177 = vector.broadcast %176 : vector<1x16xf32> to vector<256x16xf32>
    %178 = arith.addf %175, %177 : vector<256x16xf32>
    %c0_67 = arith.constant 0 : index
    %c0_68 = arith.constant 0 : index
    %c0_69 = arith.constant 0 : index
    %c0_70 = arith.constant 0 : index
    %179 = vector.load %arg1[%c0_67, %c0_68, %c0_69, %c0_70] : memref<1x16x16x16xf32, #tpu.memory_space<vmem>>, vector<1x16x16x16xf32>
    %180 = vector.shape_cast %179 : vector<1x16x16x16xf32> to vector<16x16x16xf32>
    %181 = vector.shape_cast %180 : vector<16x16x16xf32> to vector<256x16xf32>
    %182 = arith.addf %178, %181 : vector<256x16xf32>
    %183 = vector.shape_cast %182 : vector<256x16xf32> to vector<1x16x16x16xf32>
    %c0_71 = arith.constant 0 : index
    %c0_72 = arith.constant 0 : index
    %c0_73 = arith.constant 0 : index
    %c0_74 = arith.constant 0 : index
    %184 = vector.load %arg10[%c0_71, %c0_72, %c0_73, %c0_74] : memref<1x16x16x16xf32, #tpu.memory_space<vmem>>, vector<1x16x16x16xf32>
    tpu.vector_store %arg10[%c0_71, %c0_72, %c0_73, %c0_74], %183 {strides = array<i32>} : memref<1x16x16x16xf32, #tpu.memory_space<vmem>>, vector<1x16x16x16xf32>,
    return
  }
  func.func @transform_0(%arg0: i32) -> (i32, i32, i32, i32) {
    %c0_i32 = arith.constant 0 : i32
    %c0_i32_0 = arith.constant 0 : i32
    %c0_i32_1 = arith.constant 0 : i32
    %c0_i32_2 = arith.constant 0 : i32
    return %arg0, %c0_i32, %c0_i32_0, %c0_i32_1 : i32, i32, i32, i32
  }
  func.func @transform_1(%arg0: i32) -> (i32, i32) {
    %c0_i32 = arith.constant 0 : i32
    %c0_i32_0 = arith.constant 0 : i32
    %c0_i32_1 = arith.constant 0 : i32
    return %c0_i32, %c0_i32_0 : i32, i32
  }
  func.func @transform_2(%arg0: i32) -> (i32, i32) {
    %c0_i32 = arith.constant 0 : i32
    %c0_i32_0 = arith.constant 0 : i32
    %c0_i32_1 = arith.constant 0 : i32
    return %c0_i32, %c0_i32_0 : i32, i32
  }
  func.func @transform_3(%arg0: i32) -> (i32, i32, i32) {
    %c0_i32 = arith.constant 0 : i32
    %c0_i32_0 = arith.constant 0 : i32
    %c0_i32_1 = arith.constant 0 : i32
    %c0_i32_2 = arith.constant 0 : i32
    return %c0_i32, %c0_i32_0, %c0_i32_1 : i32, i32, i32
  }
  func.func @transform_4(%arg0: i32) -> (i32, i32) {
    %c0_i32 = arith.constant 0 : i32
    %c0_i32_0 = arith.constant 0 : i32
    %c0_i32_1 = arith.constant 0 : i32
    return %c0_i32, %c0_i32_0 : i32, i32
  }
  func.func @transform_5(%arg0: i32) -> (i32, i32) {
    %c0_i32 = arith.constant 0 : i32
    %c0_i32_0 = arith.constant 0 : i32
    %c0_i32_1 = arith.constant 0 : i32
    return %c0_i32, %c0_i32_0 : i32, i32
  }
  func.func @transform_6(%arg0: i32) -> (i32, i32) {
    %c0_i32 = arith.constant 0 : i32
    %c0_i32_0 = arith.constant 0 : i32
    %c0_i32_1 = arith.constant 0 : i32
    return %c0_i32, %c0_i32_0 : i32, i32
  }
  func.func @transform_7(%arg0: i32) -> (i32, i32) {
    %c0_i32 = arith.constant 0 : i32
    %c0_i32_0 = arith.constant 0 : i32
    %c0_i32_1 = arith.constant 0 : i32
    return %c0_i32, %c0_i32_0 : i32, i32
  }
  func.func @transform_8(%arg0: i32) -> (i32, i32) {
    %c0_i32 = arith.constant 0 : i32
    %c0_i32_0 = arith.constant 0 : i32
    %c0_i32_1 = arith.constant 0 : i32
    return %c0_i32, %c0_i32_0 : i32, i32
  }
  func.func @transform_9(%arg0: i32) -> (i32, i32, i32, i32) {
    %c0_i32 = arith.constant 0 : i32
    %c0_i32_0 = arith.constant 0 : i32
    %c0_i32_1 = arith.constant 0 : i32
    %c0_i32_2 = arith.constant 0 : i32
    return %arg0, %c0_i32, %c0_i32_0, %c0_i32_1 : i32, i32, i32, i32
  }
}

</mosaic_0001>

<llo_original>
// kernel: tpu_custom_call.1
$region0: #{tpu_custom_call.1}
  #allocation0 [shape = 'u32[]', space=smem, size = 0x4, offset = 0x4, fixed_abs, tag = 'smem constant byte address 0x4 - core index']
  #allocation1 [shape = 'u32[144,128]{1,0:T(1,128)}', space=vmem, size = 0x12000, scoped, tag = 'internal scratch']
  #allocation2 [shape = 'f32[18,32,64]{2,1,0:T(8,128)}', space=vmem, size = 0x48000, scoped, tag = 'scratch operand']
  #allocation3 [shape = 'f32[256,64]{1,0:T(8,128)}', space=vmem, size = 0x20000, scoped, tag = 'scratch operand']
  %s0 = inlined_call_operand.hbm [shape: f32[2,16,16,16], index: 0, kind: input, shape index: {}]
  %s1 = inlined_call_operand.hbm [shape: bf16[16,64], index: 1, kind: input, shape index: {}]
  %s2 = inlined_call_operand.hbm [shape: f32[2,64], index: 2, kind: input, shape index: {}]
  %s3 = inlined_call_operand.vmem [shape: f32[3,3,64], index: 3, kind: input, shape index: {}]
  %s4 = inlined_call_operand.hbm [shape: f32[2,64], index: 4, kind: input, shape index: {}]
  %s5 = inlined_call_operand.vmem [shape: f32[16,64], index: 5, kind: input, shape index: {}]
  %s6 = inlined_call_operand.vmem [shape: f32[16,64], index: 6, kind: input, shape index: {}]
  %s7 = inlined_call_operand.vmem [shape: bf16[64,16], index: 7, kind: input, shape index: {}]
  %s8 = inlined_call_operand.vmem [shape: f32[2,16], index: 8, kind: input, shape index: {}]
  %s9 = inlined_call_operand.hbm [shape: f32[2,16,16,16], index: 9, kind: output, shape index: {}]
  %s10 = sld [smem:[#allocation0]]
  $region85: #{tpu_custom_call.1} parent=0
    _
  %s12 = ssub.s32 1, %s10
  %s13 = scalar_select 0, %s12, %s10
  $region1: #{tpu_custom_call.1} parent=0
    #allocation4 [shape = 'u8[262144]{0}', space=vmem, size = 0x40000, scoped, tag = 'input window, operand 0']
    #allocation5 [shape = 's32[2]{0}', space=sflag, size = 0x8, scoped, tag = 'scoped memory for tpu_custom_call.1']
    #allocation6 [shape = 's32[2]{0}', space=sflag, size = 0x8, scoped, tag = 'scoped memory for tpu_custom_call.1']
    #allocation7 [shape = 'u8[4096]{0}', space=vmem, size = 0x1000, scoped, tag = 'input window, operand 1, single buffered']
    #allocation8 [shape = 's32[1]{0}', space=sflag, size = 0x4, scoped, tag = 'scoped memory for tpu_custom_call.1']
    #allocation9 [shape = 'u8[1024]{0}', space=vmem, size = 0x400, scoped, tag = 'input window, operand 2, single buffered']
    #allocation10 [shape = 'u8[1024]{0}', space=vmem, size = 0x400, scoped, tag = 'input window, operand 4, single buffered']
    #allocation11 [shape = 's32[1]{0}', space=sflag, size = 0x4, scoped, tag = 'scoped memory for tpu_custom_call.1']
    #allocation12 [shape = 'u8[262144]{0}', space=vmem, size = 0x40000, scoped, tag = 'output window, operand 0']
    %14 = vsyncpa [#allocation5], 0
    %s15 = scalar_lea.sflag [#allocation5], 1
    %16 = vsyncpa %s15, 0
    %17 = vsyncpa [#allocation8], 0
    %18 = vsyncpa [#allocation11], 0
    %19 = vsyncpa [#allocation6], 0
    %s20 = scalar_lea.sflag [#allocation6], 1
    %21 = vsyncpa %s20, 0
    loop: start=0, step=1, limit=4
    $region2: #{tpu_custom_call.1} parent=1 // loop_pre_header
      _
    $region3: #{tpu_custom_call.1} parent=1 // loop_header
      %s23 = sphi 0, %s27
      %p24 = scmp.ge.s32.totalorder %s23, 4
      %s33 = sphi 0, %s35
      %s36 = sphi 0, %s33
      %s37 = sphi 0, %s36
      %s53 = sphi 0, %s37
      %s57 = sphi 0, %s57
      %s59 = sphi 0, %s57
      %s60 = sphi 0, %s59
      %s74 = sphi 0, %s60
      %s78 = sphi 0, %s78
      %s80 = sphi 0, %s78
      %s81 = sphi 0, %s80
      %s95 = sphi 0, %s81
      %s99 = sphi 0, %s99
      %s101 = sphi 0, %s99
      %s102 = sphi 0, %s101
      %s116 = sphi 0, %s102
      %s120 = sphi 0, %s120
      %s122 = sphi 0, %s120
      %s123 = sphi 0, %s122
      %s137 = sphi 0, %s123
      %s141 = sphi 0, %s141
      %s143 = sphi 0, %s141
      %s144 = sphi 0, %s143
      %s158 = sphi 0, %s144
      %s162 = sphi 0, %s162
      %s164 = sphi 0, %s162
      %s165 = sphi 0, %s164
      %s179 = sphi 0, %s165
      %s183 = sphi 0, %s183
      %s185 = sphi 0, %s183
      %s186 = sphi 0, %s185
      %s200 = sphi 0, %s186
      %s204 = sphi 0, %s204
      %s206 = sphi 0, %s204
      %s207 = sphi 0, %s206
      %s221 = sphi 0, %s207
      %s227 = sphi 0, %s229
      %s230 = sphi 0, %s227
      %s231 = sphi 0, %s230
      %s247 = sphi 0, %s231
    $region4: #{tpu_custom_call.1} parent=1 // loop_header_branch
      %26 = sbr.rel (%p24) target = $region8
    $region5: #{tpu_custom_call.1} parent=1 // loop_body
      %s28 = ssub.s32 %s23, 1
      %s29 = ssub.s32 %s23, 2
      %s30 = sadd.s32 %s23, 1
      %s31 = ssub.s32 %s23, %s30
      %p32 = scmp.eq.s32.totalorder %s31, 0
      %s34 = sadd.s32 %s33, 1
      %s35 = scalar_select %p32, %s33, %s34
      %p38 = pneg %p32
      %p39 = scmp.eq.s32.totalorder %s23, 1
      %p40 = por %p38, %p39
      %p41 = scmp.ne.s32.totalorder %s33, %s36
      %p42 = scmp.eq.s32.totalorder %s23, 0
      %p43 = por %p41, %p42
      %p44 = scmp.ne.s32.totalorder %s33, %s36
      %p45 = scmp.eq.s32.totalorder %s28, 1
      %p46 = por %p44, %p45
      %p47 = scmp.ne.s32.totalorder %s36, %s37
      %p48 = scmp.eq.s32.totalorder %s28, 0
      %p49 = por %p47, %p48
      %p50 = scmp.ne.s32.totalorder %s36, %s37
      %p51 = scmp.eq.s32.totalorder %s29, 1
      %p52 = por %p50, %p51
      %p54 = scmp.ne.s32.totalorder %s37, %s53
      %p55 = scmp.eq.s32.totalorder %s29, 0
      %p56 = por %p54, %p55
      %s58 = sadd.s32 %s57, 1
      %p61 = scmp.eq.s32.totalorder %s23, 1
      %p62 = scmp.ne.s32.totalorder %s57, %s59
      %p63 = scmp.eq.s32.totalorder %s23, 0
      %p64 = por %p62, %p63
      %p65 = scmp.ne.s32.totalorder %s57, %s59
      %p66 = scmp.eq.s32.totalorder %s28, 1
      %p67 = por %p65, %p66
      %p68 = scmp.ne.s32.totalorder %s59, %s60
      %p69 = scmp.eq.s32.totalorder %s28, 0
      %p70 = por %p68, %p69
      %p71 = scmp.ne.s32.totalorder %s59, %s60
      %p72 = scmp.eq.s32.totalorder %s29, 1
      %p73 = por %p71, %p72
      %p75 = scmp.ne.s32.totalorder %s60, %s74
      %p76 = scmp.eq.s32.totalorder %s29, 0
      %p77 = por %p75, %p76
      %s79 = sadd.s32 %s78, 1
      %p82 = scmp.eq.s32.totalorder %s23, 1
      %p83 = scmp.ne.s32.totalorder %s78, %s80
      %p84 = scmp.eq.s32.totalorder %s23, 0
      %p85 = por %p83, %p84
      %p86 = scmp.ne.s32.totalorder %s78, %s80
      %p87 = scmp.eq.s32.totalorder %s28, 1
      %p88 = por %p86, %p87
      %p89 = scmp.ne.s32.totalorder %s80, %s81
      %p90 = scmp.eq.s32.totalorder %s28, 0
      %p91 = por %p89, %p90
      %p92 = scmp.ne.s32.totalorder %s80, %s81
      %p93 = scmp.eq.s32.totalorder %s29, 1
      %p94 = por %p92, %p93
      %p96 = scmp.ne.s32.totalorder %s81, %s95
      %p97 = scmp.eq.s32.totalorder %s29, 0
      %p98 = por %p96, %p97
      %s100 = sadd.s32 %s99, 1
      %p103 = scmp.eq.s32.totalorder %s23, 1
      %p104 = scmp.ne.s32.totalorder %s99, %s101
      %p105 = scmp.eq.s32.totalorder %s23, 0
      %p106 = por %p104, %p105
      %p107 = scmp.ne.s32.totalorder %s99, %s101
      %p108 = scmp.eq.s32.totalorder %s28, 1
      %p109 = por %p107, %p108
      %p110 = scmp.ne.s32.totalorder %s101, %s102
      %p111 = scmp.eq.s32.totalorder %s28, 0
      %p112 = por %p110, %p111
      %p113 = scmp.ne.s32.totalorder %s101, %s102
      %p114 = scmp.eq.s32.totalorder %s29, 1
      %p115 = por %p113, %p114
      %p117 = scmp.ne.s32.totalorder %s102, %s116
      %p118 = scmp.eq.s32.totalorder %s29, 0
      %p119 = por %p117, %p118
      %s121 = sadd.s32 %s120, 1
      %p124 = scmp.eq.s32.totalorder %s23, 1
      %p125 = scmp.ne.s32.totalorder %s120, %s122
      %p126 = scmp.eq.s32.totalorder %s23, 0
      %p127 = por %p125, %p126
      %p128 = scmp.ne.s32.totalorder %s120, %s122
      %p129 = scmp.eq.s32.totalorder %s28, 1
      %p130 = por %p128, %p129
      %p131 = scmp.ne.s32.totalorder %s122, %s123
      %p132 = scmp.eq.s32.totalorder %s28, 0
      %p133 = por %p131, %p132
      %p134 = scmp.ne.s32.totalorder %s122, %s123
      %p135 = scmp.eq.s32.totalorder %s29, 1
      %p136 = por %p134, %p135
      %p138 = scmp.ne.s32.totalorder %s123, %s137
      %p139 = scmp.eq.s32.totalorder %s29, 0
      %p140 = por %p138, %p139
      %s142 = sadd.s32 %s141, 1
      %p145 = scmp.eq.s32.totalorder %s23, 1
      %p146 = scmp.ne.s32.totalorder %s141, %s143
      %p147 = scmp.eq.s32.totalorder %s23, 0
      %p148 = por %p146, %p147
      %p149 = scmp.ne.s32.totalorder %s141, %s143
      %p150 = scmp.eq.s32.totalorder %s28, 1
      %p151 = por %p149, %p150
      %p152 = scmp.ne.s32.totalorder %s143, %s144
      %p153 = scmp.eq.s32.totalorder %s28, 0
      %p154 = por %p152, %p153
      %p155 = scmp.ne.s32.totalorder %s143, %s144
      %p156 = scmp.eq.s32.totalorder %s29, 1
      %p157 = por %p155, %p156
      %p159 = scmp.ne.s32.totalorder %s144, %s158
      %p160 = scmp.eq.s32.totalorder %s29, 0
      %p161 = por %p159, %p160
      %s163 = sadd.s32 %s162, 1
      %p166 = scmp.eq.s32.totalorder %s23, 1
      %p167 = scmp.ne.s32.totalorder %s162, %s164
      %p168 = scmp.eq.s32.totalorder %s23, 0
      %p169 = por %p167, %p168
      %p170 = scmp.ne.s32.totalorder %s162, %s164
      %p171 = scmp.eq.s32.totalorder %s28, 1
      %p172 = por %p170, %p171
      %p173 = scmp.ne.s32.totalorder %s164, %s165
      %p174 = scmp.eq.s32.totalorder %s28, 0
      %p175 = por %p173, %p174
      %p176 = scmp.ne.s32.totalorder %s164, %s165
      %p177 = scmp.eq.s32.totalorder %s29, 1
      %p178 = por %p176, %p177
      %p180 = scmp.ne.s32.totalorder %s165, %s179
      %p181 = scmp.eq.s32.totalorder %s29, 0
      %p182 = por %p180, %p181
      %s184 = sadd.s32 %s183, 1
      %p187 = scmp.eq.s32.totalorder %s23, 1
      %p188 = scmp.ne.s32.totalorder %s183, %s185
      %p189 = scmp.eq.s32.totalorder %s23, 0
      %p190 = por %p188, %p189
      %p191 = scmp.ne.s32.totalorder %s183, %s185
      %p192 = scmp.eq.s32.totalorder %s28, 1
      %p193 = por %p191, %p192
      %p194 = scmp.ne.s32.totalorder %s185, %s186
      %p195 = scmp.eq.s32.totalorder %s28, 0
      %p196 = por %p194, %p195
      %p197 = scmp.ne.s32.totalorder %s185, %s186
      %p198 = scmp.eq.s32.totalorder %s29, 1
      %p199 = por %p197, %p198
      %p201 = scmp.ne.s32.totalorder %s186, %s200
      %p202 = scmp.eq.s32.totalorder %s29, 0
      %p203 = por %p201, %p202
      %s205 = sadd.s32 %s204, 1
      %p208 = scmp.eq.s32.totalorder %s23, 1
      %p209 = scmp.ne.s32.totalorder %s204, %s206
      %p210 = scmp.eq.s32.totalorder %s23, 0
      %p211 = por %p209, %p210
      %p212 = scmp.ne.s32.totalorder %s204, %s206
      %p213 = scmp.eq.s32.totalorder %s28, 1
      %p214 = por %p212, %p213
      %p215 = scmp.ne.s32.totalorder %s206, %s207
      %p216 = scmp.eq.s32.totalorder %s28, 0
      %p217 = por %p215, %p216
      %p218 = scmp.ne.s32.totalorder %s206, %s207
      %p219 = scmp.eq.s32.totalorder %s29, 1
      %p220 = por %p218, %p219
      %p222 = scmp.ne.s32.totalorder %s207, %s221
      %p223 = scmp.eq.s32.totalorder %s29, 0
      %p224 = por %p222, %p223
      %s225 = ssub.s32 %s23, %s30
      %p226 = scmp.eq.s32.totalorder %s225, 0
      %s228 = sadd.s32 %s227, 1
      %s229 = scalar_select %p226, %s227, %s228
      %p232 = pneg %p226
      %p233 = scmp.eq.s32.totalorder %s23, 1
      %p234 = por %p232, %p233
      %p235 = scmp.ne.s32.totalorder %s227, %s230
      %p236 = scmp.eq.s32.totalorder %s23, 0
      %p237 = por %p235, %p236
      %p238 = scmp.ne.s32.totalorder %s227, %s230
      %p239 = scmp.eq.s32.totalorder %s28, 1
      %p240 = por %p238, %p239
      %p241 = scmp.ne.s32.totalorder %s230, %s231
      %p242 = scmp.eq.s32.totalorder %s28, 0
      %p243 = por %p241, %p242
      %p244 = scmp.ne.s32.totalorder %s230, %s231
      %p245 = scmp.eq.s32.totalorder %s29, 1
      %p246 = por %p244, %p245
      %p248 = scmp.ne.s32.totalorder %s231, %s247
      %p249 = scmp.eq.s32.totalorder %s29, 0
      %p250 = por %p248, %p249
      %p251 = scmp.le.s32.totalorder 1, %s23
      %p252 = scmp.lt.s32.totalorder %s23, 3
      %p253 = pnand %p251, %p252
      %p254 = pneg %p253
      // Predicated region
      $region9: #{tpu_custom_call.1} parent=5 // pred_check
        _
      $region10: #{tpu_custom_call.1} parent=5 // pred_check_branch
        %256 = sbr.rel (%p253) target = $region12
      $region11: #{tpu_custom_call.1} parent=5 // pred_region
        %s257 = ssub.s32 %s23, 1
        // Predicated region
        $region13: #{tpu_custom_call.1} parent=11 // pred_check
          %p258 = pneg %p70
        $region14: #{tpu_custom_call.1} parent=11 // pred_check_branch
          %260 = sbr.rel (%p258) target = $region16
        $region15: #{tpu_custom_call.1} parent=11 // pred_region
          %s262 = ssub.s32 128, 128
          %263 = vsyncadd [#allocation8], %s262
          %s264 = sshll.u32 [#allocation7], 4
          %s265 = int_to_ptr.vmem [resolvable:$true] %s264
          %270 = dma.hbm_to_vmem [thread:$0]  %s1, 128, %s265, [#allocation8], 64, 64, 4
        $region16: #{tpu_custom_call.1} parent=11 // pred_fallthru
          _
        // Predicated region
        $region17: #{tpu_custom_call.1} parent=11 // pred_check
          %p271 = pneg %p91
        $region18: #{tpu_custom_call.1} parent=11 // pred_check_branch
          %273 = sbr.rel (%p271) target = $region20
        $region19: #{tpu_custom_call.1} parent=11 // pred_region
          %s275 = ssub.s32 32, 32
          %276 = vsyncadd [#allocation8], %s275
          %s278 = sshll.u32 [#allocation9], 4
          %s279 = int_to_ptr.vmem [resolvable:$true] %s278
          %281 = dma.hbm_to_vmem [thread:$0]  %s2, 32, %s279, [#allocation8]
        $region20: #{tpu_custom_call.1} parent=11 // pred_fallthru
          _
        // Predicated region
        $region21: #{tpu_custom_call.1} parent=11 // pred_check
          %p282 = pneg %p112
        $region22: #{tpu_custom_call.1} parent=11 // pred_check_branch
          %284 = sbr.rel (%p282) target = $region24
        $region23: #{tpu_custom_call.1} parent=11 // pred_region
          _
        $region24: #{tpu_custom_call.1} parent=11 // pred_fallthru
          _
        // Predicated region
        $region25: #{tpu_custom_call.1} parent=11 // pred_check
          %p285 = pneg %p133
        $region26: #{tpu_custom_call.1} parent=11 // pred_check_branch
          %287 = sbr.rel (%p285) target = $region28
        $region27: #{tpu_custom_call.1} parent=11 // pred_region
          %s289 = ssub.s32 32, 32
          %290 = vsyncadd [#allocation11], %s289
          %s292 = sshll.u32 [#allocation10], 4
          %s293 = int_to_ptr.vmem [resolvable:$true] %s292
          %295 = dma.hbm_to_vmem [thread:$0]  %s4, 32, %s293, [#allocation11]
        $region28: #{tpu_custom_call.1} parent=11 // pred_fallthru
          _
        // Predicated region
        $region29: #{tpu_custom_call.1} parent=11 // pred_check
          %p296 = pneg %p154
        $region30: #{tpu_custom_call.1} parent=11 // pred_check_branch
          %298 = sbr.rel (%p296) target = $region32
        $region31: #{tpu_custom_call.1} parent=11 // pred_region
          _
        $region32: #{tpu_custom_call.1} parent=11 // pred_fallthru
          _
        // Predicated region
        $region33: #{tpu_custom_call.1} parent=11 // pred_check
          %p299 = pneg %p175
        $region34: #{tpu_custom_call.1} parent=11 // pred_check_branch
          %301 = sbr.rel (%p299) target = $region36
        $region35: #{tpu_custom_call.1} parent=11 // pred_region
          _
        $region36: #{tpu_custom_call.1} parent=11 // pred_fallthru
          _
        // Predicated region
        $region37: #{tpu_custom_call.1} parent=11 // pred_check
          %p302 = pneg %p196
        $region38: #{tpu_custom_call.1} parent=11 // pred_check_branch
          %304 = sbr.rel (%p302) target = $region40
        $region39: #{tpu_custom_call.1} parent=11 // pred_region
          _
        $region40: #{tpu_custom_call.1} parent=11 // pred_fallthru
          _
        // Predicated region
        $region41: #{tpu_custom_call.1} parent=11 // pred_check
          %p305 = pneg %p217
        $region42: #{tpu_custom_call.1} parent=11 // pred_check_branch
          %307 = sbr.rel (%p305) target = $region44
        $region43: #{tpu_custom_call.1} parent=11 // pred_region
          _
        $region44: #{tpu_custom_call.1} parent=11 // pred_fallthru
          _
      $region12: #{tpu_custom_call.1} parent=5 // pred_fallthru
        _
      %p308 = scmp.lt.s32.totalorder %s23, 2
      // Predicated region
      $region45: #{tpu_custom_call.1} parent=5 // pred_check
        %p309 = pneg %p308
      $region46: #{tpu_custom_call.1} parent=5 // pred_check_branch
        %311 = sbr.rel (%p309) target = $region48
      $region47: #{tpu_custom_call.1} parent=5 // pred_region
        // Predicated region
        $region49: #{tpu_custom_call.1} parent=47 // pred_check
          %p312 = pneg %p43
        $region50: #{tpu_custom_call.1} parent=47 // pred_check_branch
          %314 = sbr.rel (%p312) target = $region52
        $region51: #{tpu_custom_call.1} parent=47 // pred_region
          %s315 = sand.u32 %s33, 1
          %s316 = scalar_lea.sflag [#allocation5], %s315
          %s317 = sand.u32 %s33, 1
          %s318 = smul.addr %s317, 256
          %s319 = scalar_lea.vmem [#allocation4], %s318
          %s321 = ssub.s32 4096, 4096
          %322 = vsyncadd %s316, %s321
          %s323 = smul.addr %s23, 32
          %s324 = smul.addr %s323, 128
          %s325 = scalar_lea.hbm %s0, %s324
          %s326 = sshll.u32 %s319, 4
          %s327 = int_to_ptr.vmem [resolvable:$true] %s326
          %332 = dma.hbm_to_vmem [thread:$0]  %s325, 4096, %s327, %s316, 128, 128, 8
        $region52: #{tpu_custom_call.1} parent=47 // pred_fallthru
          _
      $region48: #{tpu_custom_call.1} parent=5 // pred_fallthru
        _
      %p333 = scmp.le.s32.totalorder 1, %s23
      %p334 = scmp.lt.s32.totalorder %s23, 3
      %p335 = pnand %p333, %p334
      %p336 = pneg %p335
      // Predicated region
      $region53: #{tpu_custom_call.1} parent=5 // pred_check
        _
      $region54: #{tpu_custom_call.1} parent=5 // pred_check_branch
        %338 = sbr.rel (%p335) target = $region56
      $region55: #{tpu_custom_call.1} parent=5 // pred_region
        %s339 = ssub.s32 %s23, 1
        %s340 = sand.u32 %s36, 1
        %s341 = scalar_lea.sflag [#allocation5], %s340
        %s342 = sand.u32 %s36, 1
        %s343 = smul.addr %s342, 256
        %s344 = scalar_lea.vmem [#allocation4], %s343
        // Predicated region
        $region57: #{tpu_custom_call.1} parent=55 // pred_check
          %p345 = pneg %p49
        $region58: #{tpu_custom_call.1} parent=55 // pred_check_branch
          %347 = sbr.rel (%p345) target = $region60
        $region59: #{tpu_custom_call.1} parent=55 // pred_region
          %348 = dma.done %s341, 4096
        $region60: #{tpu_custom_call.1} parent=55 // pred_fallthru
          _
        // Predicated region
        $region61: #{tpu_custom_call.1} parent=55 // pred_check
          %p349 = pneg %p70
        $region62: #{tpu_custom_call.1} parent=55 // pred_check_branch
          %351 = sbr.rel (%p349) target = $region64
        $region63: #{tpu_custom_call.1} parent=55 // pred_region
          %352 = dma.done [#allocation8], 128
        $region64: #{tpu_custom_call.1} parent=55 // pred_fallthru
          _
        // Predicated region
        $region65: #{tpu_custom_call.1} parent=55 // pred_check
          %p353 = pneg %p91
        $region66: #{tpu_custom_call.1} parent=55 // pred_check_branch
          %355 = sbr.rel (%p353) target = $region68
        $region67: #{tpu_custom_call.1} parent=55 // pred_region
          %356 = dma.done [#allocation8], 32
        $region68: #{tpu_custom_call.1} parent=55 // pred_fallthru
          _
        // Predicated region
        $region69: #{tpu_custom_call.1} parent=55 // pred_check
          %p357 = pneg %p133
        $region70: #{tpu_custom_call.1} parent=55 // pred_check_branch
          %359 = sbr.rel (%p357) target = $region72
        $region71: #{tpu_custom_call.1} parent=55 // pred_region
          %360 = dma.done [#allocation11], 32
        $region72: #{tpu_custom_call.1} parent=55 // pred_fallthru
          _
        %s361 = sand.u32 %s36, 1
        %s362 = scalar_lea.sflag [#allocation5], %s361
        %s363 = sand.u32 %s36, 1
        %s364 = smul.addr %s363, 256
        %s365 = scalar_lea.vmem [#allocation4], %s364
        %p366 = pneg %p49
        %p367 = pneg %p46
        %p368 = pneg %p70
        %p369 = pneg %p67
        %p370 = pneg %p91
        %p371 = pneg %p88
        %p372 = pneg %p112
        %p373 = pneg %p109
        %p374 = pneg %p133
        %p375 = pneg %p130
        %p376 = pneg %p154
        %p377 = pneg %p151
        %p378 = pneg %p175
        %p379 = pneg %p172
        %p380 = pneg %p196
        %p381 = pneg %p193
        %p382 = pneg %p217
        %p383 = pneg %p214
        %p384 = pneg %p243
        %p385 = pneg %p240
        %s386 = sand.u32 %s230, 1
        %s387 = scalar_lea.sflag [#allocation6], %s386
        %s388 = sand.u32 %s230, 1
        %s389 = smul.addr %s388, 256
        %s390 = scalar_lea.vmem [#allocation12], %s389
        %v392 = vld [vmem:[%s344] sm:$0xff]
        %v393 = vld [vmem:[%s344 + $0x8] sm:$0xff]
        %v394 = vld [vmem:[%s344 + $0x10] sm:$0xff]
        %v395 = vld [vmem:[%s344 + $0x18] sm:$0xff]
        %v396 = vld [vmem:[%s344 + $0x20] sm:$0xff]
        %v397 = vld [vmem:[%s344 + $0x28] sm:$0xff]
        %v398 = vld [vmem:[%s344 + $0x30] sm:$0xff]
        %v399 = vld [vmem:[%s344 + $0x38] sm:$0xff]
        %v400 = vld [vmem:[%s344 + $0x40] sm:$0xff]
        %v401 = vld [vmem:[%s344 + $0x48] sm:$0xff]
        %v402 = vld [vmem:[%s344 + $0x50] sm:$0xff]
        %v403 = vld [vmem:[%s344 + $0x58] sm:$0xff]
        %v404 = vld [vmem:[%s344 + $0x60] sm:$0xff]
        %v405 = vld [vmem:[%s344 + $0x68] sm:$0xff]
        %v406 = vld [vmem:[%s344 + $0x70] sm:$0xff]
        %v407 = vld [vmem:[%s344 + $0x78] sm:$0xff]
        %v408 = vld [vmem:[%s344 + $0x80] sm:$0xff]
        %v409 = vld [vmem:[%s344 + $0x88] sm:$0xff]
        %v410 = vld [vmem:[%s344 + $0x90] sm:$0xff]
        %v411 = vld [vmem:[%s344 + $0x98] sm:$0xff]
        %v412 = vld [vmem:[%s344 + $0xa0] sm:$0xff]
        %v413 = vld [vmem:[%s344 + $0xa8] sm:$0xff]
        %v414 = vld [vmem:[%s344 + $0xb0] sm:$0xff]
        %v415 = vld [vmem:[%s344 + $0xb8] sm:$0xff]
        %v416 = vld [vmem:[%s344 + $0xc0] sm:$0xff]
        %v417 = vld [vmem:[%s344 + $0xc8] sm:$0xff]
        %v418 = vld [vmem:[%s344 + $0xd0] sm:$0xff]
        %v419 = vld [vmem:[%s344 + $0xd8] sm:$0xff]
        %v420 = vld [vmem:[%s344 + $0xe0] sm:$0xff]
        %v421 = vld [vmem:[%s344 + $0xe8] sm:$0xff]
        %v422 = vld [vmem:[%s344 + $0xf0] sm:$0xff]
        %v423 = vld [vmem:[%s344 + $0xf8] sm:$0xff]
        %v424 = vpack.c.bf16 %v393, %v392
        %v425 = vpack.c.bf16 %v395, %v394
        %v426 = vpack.c.bf16 %v397, %v396
        %v427 = vpack.c.bf16 %v399, %v398
        %v428 = vpack.c.bf16 %v401, %v400
        %v429 = vpack.c.bf16 %v403, %v402
        %v430 = vpack.c.bf16 %v405, %v404
        %v431 = vpack.c.bf16 %v407, %v406
        %v432 = vpack.c.bf16 %v409, %v408
        %v433 = vpack.c.bf16 %v411, %v410
        %v434 = vpack.c.bf16 %v413, %v412
        %v435 = vpack.c.bf16 %v415, %v414
        %v436 = vpack.c.bf16 %v417, %v416
        %v437 = vpack.c.bf16 %v419, %v418
        %v438 = vpack.c.bf16 %v421, %v420
        %v439 = vpack.c.bf16 %v423, %v422
        %v440 = vld [vmem:[#allocation7] sm:$0xf]
        %v441 = vld [vmem:[#allocation7 + $0x4] sm:$0xf]
        %v444 = vunpack.c.l.b16 %v440
        %v445 = vunpack.c.l.b16 %v441
        %v446 = vpack.c.b16 %v445, %v444
        %vm448 = vcmask 130048
        %v450 = vsel %vm448, %v424, 0
        %v453 = vsel %vm448, %v425, 0
        %v456 = vsel %vm448, %v426, 0
        %v459 = vsel %vm448, %v427, 0
        %v462 = vsel %vm448, %v428, 0
        %v465 = vsel %vm448, %v429, 0
        %v468 = vsel %vm448, %v430, 0
        %v471 = vsel %vm448, %v431, 0
        %v474 = vsel %vm448, %v432, 0
        %v477 = vsel %vm448, %v433, 0
        %v480 = vsel %vm448, %v434, 0
        %v483 = vsel %vm448, %v435, 0
        %v486 = vsel %vm448, %v436, 0
        %v489 = vsel %vm448, %v437, 0
        %v492 = vsel %vm448, %v438, 0
        %v495 = vsel %vm448, %v439, 0
        %497 = vmatprep.subr.bf16.mxu0 0
        %498 = vmatpush1.bf16.msra.mxu0 0
        %499 = vmatprep.subr.bf16.mxu0 0
        %500 = vmatpush1.bf16.msra.mxu0 0
        %501 = vmatprep.subr.bf16.mxu0 0
        %502 = vmatpush1.bf16.msra.mxu0 0
        %503 = vmatprep.subr.bf16.mxu0 0
        %504 = vmatpush1.bf16.msra.mxu0 0
        %505 = vmatprep.subr.bf16.mxu0 0
        %506 = vmatpush1.bf16.msra.mxu0 0
        %507 = vmatprep.subr.bf16.mxu0 0
        %508 = vmatpush1.bf16.msra.mxu0 0
        %509 = vmatprep.subr.bf16.mxu0 0
        %510 = vmatpush1.bf16.msra.mxu0 0
        %511 = vmatprep.subr.bf16.mxu0 0
        %512 = vmatpush1.bf16.msra.mxu0 %v446
        %513 = vmatprep.subr.bf16.mxu0 0
        %514 = vmatpush2.bf16.msra.mxu0 0
        %515 = vmatprep.subr.bf16.mxu0 0
        %516 = vmatpush2.bf16.msra.mxu0 0
        %517 = vmatprep.subr.bf16.mxu0 0
        %518 = vmatpush2.bf16.msra.mxu0 0
        %519 = vmatprep.subr.bf16.mxu0 0
        %520 = vmatpush2.bf16.msra.mxu0 0
        %521 = vmatprep.subr.bf16.mxu0 0
        %522 = vmatpush2.bf16.msra.mxu0 0
        %523 = vmatprep.subr.bf16.mxu0 0
        %524 = vmatpush2.bf16.msra.mxu0 0
        %525 = vmatprep.subr.bf16.mxu0 0
        %526 = vmatpush2.bf16.msra.mxu0 0
        %527 = vmatprep.subr.bf16.mxu0 0
        %528 = vmatpush2.bf16.msra.mxu0 0
        %529 = vmatprep.mubr.bf16.mxu0 0
        %530 = vmatmul.mubr.bf16.gmra.mxu0 %v450
        %v531 = vpop.f32.mrf.mxu0
        %v532 = vadd.f32 0.0, %v531
        %v533 = vpop.f32.mrf.mxu0
        %v534 = vpop.f32.mrf.mxu0
        %v535 = vadd.f32 0.0, %v534
        %v536 = vpop.f32.mrf.mxu0
        %537 = vmatprep.mubr.bf16.mxu0 0
        %538 = vmatmul.mubr.bf16.gmra.mxu0 %v453
        %v539 = vpop.f32.mrf.mxu0
        %v540 = vadd.f32 0.0, %v539
        %v541 = vpop.f32.mrf.mxu0
        %v542 = vpop.f32.mrf.mxu0
        %v543 = vadd.f32 0.0, %v542
        %v544 = vpop.f32.mrf.mxu0
        %545 = vmatprep.mubr.bf16.mxu0 0
        %546 = vmatmul.mubr.bf16.gmra.mxu0 %v456
        %v547 = vpop.f32.mrf.mxu0
        %v548 = vadd.f32 0.0, %v547
        %v549 = vpop.f32.mrf.mxu0
        %v550 = vpop.f32.mrf.mxu0
        %v551 = vadd.f32 0.0, %v550
        %v552 = vpop.f32.mrf.mxu0
        %553 = vmatprep.mubr.bf16.mxu0 0
        %554 = vmatmul.mubr.bf16.gmra.mxu0 %v459
        %v555 = vpop.f32.mrf.mxu0
        %v556 = vadd.f32 0.0, %v555
        %v557 = vpop.f32.mrf.mxu0
        %v558 = vpop.f32.mrf.mxu0
        %v559 = vadd.f32 0.0, %v558
        %v560 = vpop.f32.mrf.mxu0
        %561 = vmatprep.mubr.bf16.mxu0 0
        %562 = vmatmul.mubr.bf16.gmra.mxu0 %v462
        %v563 = vpop.f32.mrf.mxu0
        %v564 = vadd.f32 0.0, %v563
        %v565 = vpop.f32.mrf.mxu0
        %v566 = vpop.f32.mrf.mxu0
        %v567 = vadd.f32 0.0, %v566
        %v568 = vpop.f32.mrf.mxu0
        %569 = vmatprep.mubr.bf16.mxu0 0
        %570 = vmatmul.mubr.bf16.gmra.mxu0 %v465
        %v571 = vpop.f32.mrf.mxu0
        %v572 = vadd.f32 0.0, %v571
        %v573 = vpop.f32.mrf.mxu0
        %v574 = vpop.f32.mrf.mxu0
        %v575 = vadd.f32 0.0, %v574
        %v576 = vpop.f32.mrf.mxu0
        %577 = vmatprep.mubr.bf16.mxu0 0
        %578 = vmatmul.mubr.bf16.gmra.mxu0 %v468
        %v579 = vpop.f32.mrf.mxu0
        %v580 = vadd.f32 0.0, %v579
        %v581 = vpop.f32.mrf.mxu0
        %v582 = vpop.f32.mrf.mxu0
        %v583 = vadd.f32 0.0, %v582
        %v584 = vpop.f32.mrf.mxu0
        %585 = vmatprep.mubr.bf16.mxu0 0
        %586 = vmatmul.mubr.bf16.gmra.mxu0 %v471
        %v587 = vpop.f32.mrf.mxu0
        %v588 = vadd.f32 0.0, %v587
        %v589 = vpop.f32.mrf.mxu0
        %v590 = vpop.f32.mrf.mxu0
        %v591 = vadd.f32 0.0, %v590
        %v592 = vpop.f32.mrf.mxu0
        %593 = vmatprep.mubr.bf16.mxu0 0
        %594 = vmatmul.mubr.bf16.gmra.mxu0 %v474
        %v595 = vpop.f32.mrf.mxu0
        %v596 = vadd.f32 0.0, %v595
        %v597 = vpop.f32.mrf.mxu0
        %v598 = vpop.f32.mrf.mxu0
        %v599 = vadd.f32 0.0, %v598
        %v600 = vpop.f32.mrf.mxu0
        %601 = vmatprep.mubr.bf16.mxu0 0
        %602 = vmatmul.mubr.bf16.gmra.mxu0 %v477
        %v603 = vpop.f32.mrf.mxu0
        %v604 = vadd.f32 0.0, %v603
        %v605 = vpop.f32.mrf.mxu0
        %v606 = vpop.f32.mrf.mxu0
        %v607 = vadd.f32 0.0, %v606
        %v608 = vpop.f32.mrf.mxu0
        %609 = vmatprep.mubr.bf16.mxu0 0
        %610 = vmatmul.mubr.bf16.gmra.mxu0 %v480
        %v611 = vpop.f32.mrf.mxu0
        %v612 = vadd.f32 0.0, %v611
        %v613 = vpop.f32.mrf.mxu0
        %v614 = vpop.f32.mrf.mxu0
        %v615 = vadd.f32 0.0, %v614
        %v616 = vpop.f32.mrf.mxu0
        %617 = vmatprep.mubr.bf16.mxu0 0
        %618 = vmatmul.mubr.bf16.gmra.mxu0 %v483
        %v619 = vpop.f32.mrf.mxu0
        %v620 = vadd.f32 0.0, %v619
        %v621 = vpop.f32.mrf.mxu0
        %v622 = vpop.f32.mrf.mxu0
        %v623 = vadd.f32 0.0, %v622
        %v624 = vpop.f32.mrf.mxu0
        %625 = vmatprep.mubr.bf16.mxu0 0
        %626 = vmatmul.mubr.bf16.gmra.mxu0 %v486
        %v627 = vpop.f32.mrf.mxu0
        %v628 = vadd.f32 0.0, %v627
        %v629 = vpop.f32.mrf.mxu0
        %v630 = vpop.f32.mrf.mxu0
        %v631 = vadd.f32 0.0, %v630
        %v632 = vpop.f32.mrf.mxu0
        %633 = vmatprep.mubr.bf16.mxu0 0
        %634 = vmatmul.mubr.bf16.gmra.mxu0 %v489
        %v635 = vpop.f32.mrf.mxu0
        %v636 = vadd.f32 0.0, %v635
        %v637 = vpop.f32.mrf.mxu0
        %v638 = vpop.f32.mrf.mxu0
        %v639 = vadd.f32 0.0, %v638
        %v640 = vpop.f32.mrf.mxu0
        %641 = vmatprep.mubr.bf16.mxu0 0
        %642 = vmatmul.mubr.bf16.gmra.mxu0 %v492
        %v643 = vpop.f32.mrf.mxu0
        %v644 = vadd.f32 0.0, %v643
        %v645 = vpop.f32.mrf.mxu0
        %v646 = vpop.f32.mrf.mxu0
        %v647 = vadd.f32 0.0, %v646
        %v648 = vpop.f32.mrf.mxu0
        %649 = vmatprep.mubr.bf16.mxu0 0
        %650 = vmatmul.mubr.bf16.gmra.mxu0 %v495
        %v651 = vpop.f32.mrf.mxu0
        %v652 = vadd.f32 0.0, %v651
        %v653 = vpop.f32.mrf.mxu0
        %v654 = vpop.f32.mrf.mxu0
        %v655 = vadd.f32 0.0, %v654
        %v656 = vpop.f32.mrf.mxu0
        %657 = vdwg.mxu0
        %v658 = vld [vmem:[#allocation9] sm:$0x1]
        %v659 = vlaneseq
        %v660 = vshrl.u32 %v659, 7
        %v661 = vsub.s32 0, %v660
        %v662 = vrot.slane %v658, %v661
        %v663 = vmul.f32 %v532, %v662
        %v664 = vmul.f32 %v535, %v662
        %v665 = vmul.f32 %v540, %v662
        %v666 = vmul.f32 %v543, %v662
        %v667 = vmul.f32 %v548, %v662
        %v668 = vmul.f32 %v551, %v662
        %v669 = vmul.f32 %v556, %v662
        %v670 = vmul.f32 %v559, %v662
        %v671 = vmul.f32 %v564, %v662
        %v672 = vmul.f32 %v567, %v662
        %v673 = vmul.f32 %v572, %v662
        %v674 = vmul.f32 %v575, %v662
        %v675 = vmul.f32 %v580, %v662
        %v676 = vmul.f32 %v583, %v662
        %v677 = vmul.f32 %v588, %v662
        %v678 = vmul.f32 %v591, %v662
        %v679 = vmul.f32 %v596, %v662
        %v680 = vmul.f32 %v599, %v662
        %v681 = vmul.f32 %v604, %v662
        %v682 = vmul.f32 %v607, %v662
        %v683 = vmul.f32 %v612, %v662
        %v684 = vmul.f32 %v615, %v662
        %v685 = vmul.f32 %v620, %v662
        %v686 = vmul.f32 %v623, %v662
        %v687 = vmul.f32 %v628, %v662
        %v688 = vmul.f32 %v631, %v662
        %v689 = vmul.f32 %v636, %v662
        %v690 = vmul.f32 %v639, %v662
        %v691 = vmul.f32 %v644, %v662
        %v692 = vmul.f32 %v647, %v662
        %v693 = vmul.f32 %v652, %v662
        %v694 = vmul.f32 %v655, %v662
        %v695 = vld [vmem:[#allocation9 + $0x1] sm:$0x1]
        %v696 = vlaneseq
        %v697 = vshrl.u32 %v696, 7
        %v698 = vsub.s32 0, %v697
        %v699 = vrot.slane %v695, %v698
        %v700 = vadd.f32 %v663, %v699
        %v701 = vadd.f32 %v664, %v699
        %v702 = vadd.f32 %v665, %v699
        %v703 = vadd.f32 %v666, %v699
        %v704 = vadd.f32 %v667, %v699
        %v705 = vadd.f32 %v668, %v699
        %v706 = vadd.f32 %v669, %v699
        %v707 = vadd.f32 %v670, %v699
        %v708 = vadd.f32 %v671, %v699
        %v709 = vadd.f32 %v672, %v699
        %v710 = vadd.f32 %v673, %v699
        %v711 = vadd.f32 %v674, %v699
        %v712 = vadd.f32 %v675, %v699
        %v713 = vadd.f32 %v676, %v699
        %v714 = vadd.f32 %v677, %v699
        %v715 = vadd.f32 %v678, %v699
        %v716 = vadd.f32 %v679, %v699
        %v717 = vadd.f32 %v680, %v699
        %v718 = vadd.f32 %v681, %v699
        %v719 = vadd.f32 %v682, %v699
        %v720 = vadd.f32 %v683, %v699
        %v721 = vadd.f32 %v684, %v699
        %v722 = vadd.f32 %v685, %v699
        %v723 = vadd.f32 %v686, %v699
        %v724 = vadd.f32 %v687, %v699
        %v725 = vadd.f32 %v688, %v699
        %v726 = vadd.f32 %v689, %v699
        %v727 = vadd.f32 %v690, %v699
        %v728 = vadd.f32 %v691, %v699
        %v729 = vadd.f32 %v692, %v699
        %v730 = vadd.f32 %v693, %v699
        %v731 = vadd.f32 %v694, %v699
        %v732 = vmax.f32 %v700, 0.0
        %v733 = vmax.f32 %v701, 0.0
        %v734 = vmax.f32 %v702, 0.0
        %v735 = vmax.f32 %v703, 0.0
        %v736 = vmax.f32 %v704, 0.0
        %v737 = vmax.f32 %v705, 0.0
        %v738 = vmax.f32 %v706, 0.0
        %v739 = vmax.f32 %v707, 0.0
        %v740 = vmax.f32 %v708, 0.0
        %v741 = vmax.f32 %v709, 0.0
        %v742 = vmax.f32 %v710, 0.0
        %v743 = vmax.f32 %v711, 0.0
        %v744 = vmax.f32 %v712, 0.0
        %v745 = vmax.f32 %v713, 0.0
        %v746 = vmax.f32 %v714, 0.0
        %v747 = vmax.f32 %v715, 0.0
        %v748 = vmax.f32 %v716, 0.0
        %v749 = vmax.f32 %v717, 0.0
        %v750 = vmax.f32 %v718, 0.0
        %v751 = vmax.f32 %v719, 0.0
        %v752 = vmax.f32 %v720, 0.0
        %v753 = vmax.f32 %v721, 0.0
        %v754 = vmax.f32 %v722, 0.0
        %v755 = vmax.f32 %v723, 0.0
        %v756 = vmax.f32 %v724, 0.0
        %v757 = vmax.f32 %v725, 0.0
        %v758 = vmax.f32 %v726, 0.0
        %v759 = vmax.f32 %v727, 0.0
        %v760 = vmax.f32 %v728, 0.0
        %v761 = vmax.f32 %v729, 0.0
        %v762 = vmax.f32 %v730, 0.0
        %v763 = vmax.f32 %v731, 0.0
        %vm764 = vcmask 523264
        %765 = vst.msk [vmem:[#allocation2] sm:$0xff] %vm764, 0.0
        %766 = vst.msk [vmem:[#allocation2 + $0x20] sm:$0xff] %vm764, 0.0
        %767 = vst.msk [vmem:[#allocation2 + $0x40] sm:$0xff] %vm764, 0.0
        %768 = vst.msk [vmem:[#allocation2 + $0x60] sm:$0xff] %vm764, 0.0
        %769 = vst.msk [vmem:[#allocation2 + $0x80] sm:$0xff] %vm764, 0.0
        %770 = vst.msk [vmem:[#allocation2 + $0xa0] sm:$0xff] %vm764, 0.0
        %771 = vst.msk [vmem:[#allocation2 + $0xc0] sm:$0xff] %vm764, 0.0
        %772 = vst.msk [vmem:[#allocation2 + $0xe0] sm:$0xff] %vm764, 0.0
        %773 = vst.msk [vmem:[#allocation2 + $0x100] sm:$0xff] %vm764, 0.0
        %774 = vst.msk [vmem:[#allocation2 + $0x120] sm:$0xff] %vm764, 0.0
        %775 = vst.msk [vmem:[#allocation2 + $0x140] sm:$0xff] %vm764, 0.0
        %776 = vst.msk [vmem:[#allocation2 + $0x160] sm:$0xff] %vm764, 0.0
        %777 = vst.msk [vmem:[#allocation2 + $0x180] sm:$0xff] %vm764, 0.0
        %778 = vst.msk [vmem:[#allocation2 + $0x1a0] sm:$0xff] %vm764, 0.0
        %779 = vst.msk [vmem:[#allocation2 + $0x1c0] sm:$0xff] %vm764, 0.0
        %780 = vst.msk [vmem:[#allocation2 + $0x1e0] sm:$0xff] %vm764, 0.0
        %781 = vst.msk [vmem:[#allocation2 + $0x200] sm:$0xff] %vm764, 0.0
        %782 = vst.msk [vmem:[#allocation2 + $0x220] sm:$0xff] %vm764, 0.0
        %783 = vst.msk [vmem:[#allocation2 + $0x18] sm:$0xff] %vm764, 0.0
        %784 = vst.msk [vmem:[#allocation2 + $0x38] sm:$0xff] %vm764, 0.0
        %785 = vst.msk [vmem:[#allocation2 + $0x58] sm:$0xff] %vm764, 0.0
        %786 = vst.msk [vmem:[#allocation2 + $0x78] sm:$0xff] %vm764, 0.0
        %787 = vst.msk [vmem:[#allocation2 + $0x98] sm:$0xff] %vm764, 0.0
        %788 = vst.msk [vmem:[#allocation2 + $0xb8] sm:$0xff] %vm764, 0.0
        %789 = vst.msk [vmem:[#allocation2 + $0xd8] sm:$0xff] %vm764, 0.0
        %790 = vst.msk [vmem:[#allocation2 + $0xf8] sm:$0xff] %vm764, 0.0
        %791 = vst.msk [vmem:[#allocation2 + $0x118] sm:$0xff] %vm764, 0.0
        %792 = vst.msk [vmem:[#allocation2 + $0x138] sm:$0xff] %vm764, 0.0
        %793 = vst.msk [vmem:[#allocation2 + $0x158] sm:$0xff] %vm764, 0.0
        %794 = vst.msk [vmem:[#allocation2 + $0x178] sm:$0xff] %vm764, 0.0
        %795 = vst.msk [vmem:[#allocation2 + $0x198] sm:$0xff] %vm764, 0.0
        %796 = vst.msk [vmem:[#allocation2 + $0x1b8] sm:$0xff] %vm764, 0.0
        %797 = vst.msk [vmem:[#allocation2 + $0x1d8] sm:$0xff] %vm764, 0.0
        %798 = vst.msk [vmem:[#allocation2 + $0x1f8] sm:$0xff] %vm764, 0.0
        %799 = vst.msk [vmem:[#allocation2 + $0x218] sm:$0xff] %vm764, 0.0
        %800 = vst.msk [vmem:[#allocation2 + $0x238] sm:$0xff] %vm764, 0.0
        %801 = vst.msk [vmem:[#allocation2 + $0x8] sm:$0xff] %vm764, 0.0
        %802 = vst.msk [vmem:[#allocation2 + $0x10] sm:$0xff] %vm764, 0.0
        %s803 = scalar_lea.vmem [#allocation2], 544
        %804 = vst.msk [vmem:[%s803 + $0x8] sm:$0xff] %vm764, 0.0
        %805 = vst.msk [vmem:[%s803 + $0x10] sm:$0xff] %vm764, 0.0
        %s806 = scalar_lea.vmem [#allocation2], 32
        %807 = vst.msk [vmem:[%s806 + $0x8] sm:$0xff] %vm764, %v732
        %808 = vst.msk [vmem:[%s806 + $0x10] sm:$0xff] %vm764, %v733
        %809 = vst.msk [vmem:[%s806 + $0x28] sm:$0xff] %vm764, %v734
        %810 = vst.msk [vmem:[%s806 + $0x30] sm:$0xff] %vm764, %v735
        %811 = vst.msk [vmem:[%s806 + $0x48] sm:$0xff] %vm764, %v736
        %812 = vst.msk [vmem:[%s806 + $0x50] sm:$0xff] %vm764, %v737
        %813 = vst.msk [vmem:[%s806 + $0x68] sm:$0xff] %vm764, %v738
        %814 = vst.msk [vmem:[%s806 + $0x70] sm:$0xff] %vm764, %v739
        %815 = vst.msk [vmem:[%s806 + $0x88] sm:$0xff] %vm764, %v740
        %816 = vst.msk [vmem:[%s806 + $0x90] sm:$0xff] %vm764, %v741
        %817 = vst.msk [vmem:[%s806 + $0xa8] sm:$0xff] %vm764, %v742
        %818 = vst.msk [vmem:[%s806 + $0xb0] sm:$0xff] %vm764, %v743
        %819 = vst.msk [vmem:[%s806 + $0xc8] sm:$0xff] %vm764, %v744
        %820 = vst.msk [vmem:[%s806 + $0xd0] sm:$0xff] %vm764, %v745
        %821 = vst.msk [vmem:[%s806 + $0xe8] sm:$0xff] %vm764, %v746
        %822 = vst.msk [vmem:[%s806 + $0xf0] sm:$0xff] %vm764, %v747
        %823 = vst.msk [vmem:[%s806 + $0x108] sm:$0xff] %vm764, %v748
        %824 = vst.msk [vmem:[%s806 + $0x110] sm:$0xff] %vm764, %v749
        %825 = vst.msk [vmem:[%s806 + $0x128] sm:$0xff] %vm764, %v750
        %826 = vst.msk [vmem:[%s806 + $0x130] sm:$0xff] %vm764, %v751
        %827 = vst.msk [vmem:[%s806 + $0x148] sm:$0xff] %vm764, %v752
        %828 = vst.msk [vmem:[%s806 + $0x150] sm:$0xff] %vm764, %v753
        %829 = vst.msk [vmem:[%s806 + $0x168] sm:$0xff] %vm764, %v754
        %830 = vst.msk [vmem:[%s806 + $0x170] sm:$0xff] %vm764, %v755
        %831 = vst.msk [vmem:[%s806 + $0x188] sm:$0xff] %vm764, %v756
        %832 = vst.msk [vmem:[%s806 + $0x190] sm:$0xff] %vm764, %v757
        %833 = vst.msk [vmem:[%s806 + $0x1a8] sm:$0xff] %vm764, %v758
        %834 = vst.msk [vmem:[%s806 + $0x1b0] sm:$0xff] %vm764, %v759
        %835 = vst.msk [vmem:[%s806 + $0x1c8] sm:$0xff] %vm764, %v760
        %836 = vst.msk [vmem:[%s806 + $0x1d0] sm:$0xff] %vm764, %v761
        %837 = vst.msk [vmem:[%s806 + $0x1e8] sm:$0xff] %vm764, %v762
        %838 = vst.msk [vmem:[%s806 + $0x1f0] sm:$0xff] %vm764, %v763
        %v839 = vld [vmem:[%s3] sm:$0x7]
        %v840 = vld [vmem:[%s3 + $0x4] sm:$0x7]
        %v841 = vld [vmem:[%s3 + $0x8] sm:$0x7]
        %v842 = vld [vmem:[#allocation2] sm:$0xff]
        %v843 = vld [vmem:[#allocation2 + $0x8] sm:$0xff]
        %v844 = vld [vmem:[#allocation2 + $0x10] sm:$0xff]
        %v845 = vld [vmem:[#allocation2 + $0x18] sm:$0xff]
        %v846 = vld [vmem:[#allocation2 + $0x20] sm:$0xff]
        %v847 = vld [vmem:[#allocation2 + $0x28] sm:$0xff]
        %v848 = vld [vmem:[#allocation2 + $0x30] sm:$0xff]
        %v849 = vld [vmem:[#allocation2 + $0x38] sm:$0xff]
        %v850 = vld [vmem:[#allocation2 + $0x40] sm:$0xff]
        %v851 = vld [vmem:[#allocation2 + $0x48] sm:$0xff]
        %v852 = vld [vmem:[#allocation2 + $0x50] sm:$0xff]
        %v853 = vld [vmem:[#allocation2 + $0x58] sm:$0xff]
        %v854 = vld [vmem:[#allocation2 + $0x60] sm:$0xff]
        %v855 = vld [vmem:[#allocation2 + $0x68] sm:$0xff]
        %v856 = vld [vmem:[#allocation2 + $0x70] sm:$0xff]
        %v857 = vld [vmem:[#allocation2 + $0x78] sm:$0xff]
        %v858 = vld [vmem:[#allocation2 + $0x80] sm:$0xff]
        %v859 = vld [vmem:[#allocation2 + $0x88] sm:$0xff]
        %v860 = vld [vmem:[#allocation2 + $0x90] sm:$0xff]
        %v861 = vld [vmem:[#allocation2 + $0x98] sm:$0xff]
        %v862 = vld [vmem:[#allocation2 + $0xa0] sm:$0xff]
        %v863 = vld [vmem:[#allocation2 + $0xa8] sm:$0xff]
        %v864 = vld [vmem:[#allocation2 + $0xb0] sm:$0xff]
        %v865 = vld [vmem:[#allocation2 + $0xb8] sm:$0xff]
        %v866 = vld [vmem:[#allocation2 + $0xc0] sm:$0xff]
        %v867 = vld [vmem:[#allocation2 + $0xc8] sm:$0xff]
        %v868 = vld [vmem:[#allocation2 + $0xd0] sm:$0xff]
        %v869 = vld [vmem:[#allocation2 + $0xd8] sm:$0xff]
        %v870 = vld [vmem:[#allocation2 + $0xe0] sm:$0xff]
        %v871 = vld [vmem:[#allocation2 + $0xe8] sm:$0xff]
        %v872 = vld [vmem:[#allocation2 + $0xf0] sm:$0xff]
        %v873 = vld [vmem:[#allocation2 + $0xf8] sm:$0xff]
        %v874 = vld [vmem:[#allocation2 + $0x100] sm:$0xff]
        %v875 = vld [vmem:[#allocation2 + $0x108] sm:$0xff]
        %v876 = vld [vmem:[#allocation2 + $0x110] sm:$0xff]
        %v877 = vld [vmem:[#allocation2 + $0x118] sm:$0xff]
        %v878 = vld [vmem:[#allocation2 + $0x120] sm:$0xff]
        %v879 = vld [vmem:[#allocation2 + $0x128] sm:$0xff]
        %v880 = vld [vmem:[#allocation2 + $0x130] sm:$0xff]
        %v881 = vld [vmem:[#allocation2 + $0x138] sm:$0xff]
        %v882 = vrot.slane %v842, 7
        %v883 = vrot.slane %v843, 7
        %v884 = vrot.slane %v844, 7
        %v885 = vrot.slane %v846, 7
        %v886 = vrot.slane %v847, 7
        %v887 = vrot.slane %v848, 7
        %v888 = vrot.slane %v850, 7
        %v889 = vrot.slane %v851, 7
        %v890 = vrot.slane %v852, 7
        %v891 = vrot.slane %v854, 7
        %v892 = vrot.slane %v855, 7
        %v893 = vrot.slane %v856, 7
        %v894 = vrot.slane %v858, 7
        %v895 = vrot.slane %v859, 7
        %v896 = vrot.slane %v860, 7
        %v897 = vrot.slane %v862, 7
        %v898 = vrot.slane %v863, 7
        %v899 = vrot.slane %v864, 7
        %v900 = vrot.slane %v866, 7
        %v901 = vrot.slane %v867, 7
        %v902 = vrot.slane %v868, 7
        %v903 = vrot.slane %v870, 7
        %v904 = vrot.slane %v871, 7
        %v905 = vrot.slane %v872, 7
        %v906 = vrot.slane %v874, 7
        %v907 = vrot.slane %v875, 7
        %v908 = vrot.slane %v876, 7
        %v909 = vrot.slane %v878, 7
        %v910 = vrot.slane %v879, 7
        %v911 = vrot.slane %v880, 7
        %v912 = vlaneseq
        %v913 = vshrl.u32 %v912, 7
        %vm914 = vcmp.lt.s32.totalorder %v913, 1
        %v915 = vsel %vm914, %v910, %v911
        %v916 = vsel %vm914, %v909, %v910
        %v917 = vsel %vm914, %v907, %v908
        %v918 = vsel %vm914, %v906, %v907
        %v919 = vsel %vm914, %v904, %v905
        %v920 = vsel %vm914, %v903, %v904
        %v921 = vsel %vm914, %v901, %v902
        %v922 = vsel %vm914, %v900, %v901
        %v923 = vsel %vm914, %v898, %v899
        %v924 = vsel %vm914, %v897, %v898
        %v925 = vsel %vm914, %v895, %v896
        %v926 = vsel %vm914, %v894, %v895
        %v927 = vsel %vm914, %v892, %v893
        %v928 = vsel %vm914, %v891, %v892
        %v929 = vsel %vm914, %v889, %v890
        %v930 = vsel %vm914, %v888, %v889
        %v931 = vsel %vm914, %v886, %v887
        %v932 = vsel %vm914, %v885, %v886
        %v933 = vsel %vm914, %v883, %v884
        %v934 = vsel %vm914, %v882, %v883
        %v935 = vlaneseq
        %v936 = vshrl.u32 %v935, 7
        %v937 = vsub.s32 0, %v936
        %v938 = vrot.slane %v839, %v937
        %v939 = vmul.f32 %v934, %v938
        %v940 = vmul.f32 %v933, %v938
        %v941 = vmul.f32 %v932, %v938
        %v942 = vmul.f32 %v931, %v938
        %v943 = vmul.f32 %v930, %v938
        %v944 = vmul.f32 %v929, %v938
        %v945 = vmul.f32 %v928, %v938
        %v946 = vmul.f32 %v927, %v938
        %v947 = vmul.f32 %v926, %v938
        %v948 = vmul.f32 %v925, %v938
        %v949 = vmul.f32 %v924, %v938
        %v950 = vmul.f32 %v923, %v938
        %v951 = vmul.f32 %v922, %v938
        %v952 = vmul.f32 %v921, %v938
        %v953 = vmul.f32 %v920, %v938
        %v954 = vmul.f32 %v919, %v938
        %v955 = vadd.f32 %v939, 0.0
        %v956 = vadd.f32 %v940, 0.0
        %v957 = vadd.f32 %v941, 0.0
        %v958 = vadd.f32 %v942, 0.0
        %v959 = vadd.f32 %v943, 0.0
        %v960 = vadd.f32 %v944, 0.0
        %v961 = vadd.f32 %v945, 0.0
        %v962 = vadd.f32 %v946, 0.0
        %v963 = vadd.f32 %v947, 0.0
        %v964 = vadd.f32 %v948, 0.0
        %v965 = vadd.f32 %v949, 0.0
        %v966 = vadd.f32 %v950, 0.0
        %v967 = vadd.f32 %v951, 0.0
        %v968 = vadd.f32 %v952, 0.0
        %v969 = vadd.f32 %v953, 0.0
        %v970 = vadd.f32 %v954, 0.0
        %v971 = vlaneseq
        %v972 = vshrl.u32 %v971, 7
        %v973 = vsub.s32 0, %v972
        %v974 = vrot.slane %v840, %v973
        %v975 = vmul.f32 %v932, %v974
        %v976 = vmul.f32 %v931, %v974
        %v977 = vmul.f32 %v930, %v974
        %v978 = vmul.f32 %v929, %v974
        %v979 = vmul.f32 %v928, %v974
        %v980 = vmul.f32 %v927, %v974
        %v981 = vmul.f32 %v926, %v974
        %v982 = vmul.f32 %v925, %v974
        %v983 = vmul.f32 %v924, %v974
        %v984 = vmul.f32 %v923, %v974
        %v985 = vmul.f32 %v922, %v974
        %v986 = vmul.f32 %v921, %v974
        %v987 = vmul.f32 %v920, %v974
        %v988 = vmul.f32 %v919, %v974
        %v989 = vmul.f32 %v918, %v974
        %v990 = vmul.f32 %v917, %v974
        %v991 = vadd.f32 %v955, %v975
        %v992 = vadd.f32 %v956, %v976
        %v993 = vadd.f32 %v957, %v977
        %v994 = vadd.f32 %v958, %v978
        %v995 = vadd.f32 %v959, %v979
        %v996 = vadd.f32 %v960, %v980
        %v997 = vadd.f32 %v961, %v981
        %v998 = vadd.f32 %v962, %v982
        %v999 = vadd.f32 %v963, %v983
        %v1000 = vadd.f32 %v964, %v984
        %v1001 = vadd.f32 %v965, %v985
        %v1002 = vadd.f32 %v966, %v986
        %v1003 = vadd.f32 %v967, %v987
        %v1004 = vadd.f32 %v968, %v988
        %v1005 = vadd.f32 %v969, %v989
        %v1006 = vadd.f32 %v970, %v990
        %v1007 = vlaneseq
        %v1008 = vshrl.u32 %v1007, 7
        %v1009 = vsub.s32 0, %v1008
        %v1010 = vrot.slane %v841, %v1009
        %v1011 = vmul.f32 %v930, %v1010
        %v1012 = vmul.f32 %v929, %v1010
        %v1013 = vmul.f32 %v928, %v1010
        %v1014 = vmul.f32 %v927, %v1010
        %v1015 = vmul.f32 %v926, %v1010
        %v1016 = vmul.f32 %v925, %v1010
        %v1017 = vmul.f32 %v924, %v1010
        %v1018 = vmul.f32 %v923, %v1010
        %v1019 = vmul.f32 %v922, %v1010
        %v1020 = vmul.f32 %v921, %v1010
        %v1021 = vmul.f32 %v920, %v1010
        %v1022 = vmul.f32 %v919, %v1010
        %v1023 = vmul.f32 %v918, %v1010
        %v1024 = vmul.f32 %v917, %v1010
        %v1025 = vmul.f32 %v916, %v1010
        %v1026 = vmul.f32 %v915, %v1010
        %v1027 = vadd.f32 %v991, %v1011
        %v1028 = vadd.f32 %v992, %v1012
        %v1029 = vadd.f32 %v993, %v1013
        %v1030 = vadd.f32 %v994, %v1014
        %v1031 = vadd.f32 %v995, %v1015
        %v1032 = vadd.f32 %v996, %v1016
        %v1033 = vadd.f32 %v997, %v1017
        %v1034 = vadd.f32 %v998, %v1018
        %v1035 = vadd.f32 %v999, %v1019
        %v1036 = vadd.f32 %v1000, %v1020
        %v1037 = vadd.f32 %v1001, %v1021
        %v1038 = vadd.f32 %v1002, %v1022
        %v1039 = vadd.f32 %v1003, %v1023
        %v1040 = vadd.f32 %v1004, %v1024
        %v1041 = vadd.f32 %v1005, %v1025
        %v1042 = vadd.f32 %v1006, %v1026
        %v1043 = vlaneseq
        %v1044 = vshrl.u32 %v1043, 7
        %v1045 = vsub.s32 1, %v1044
        %v1046 = vrot.slane %v839, %v1045
        %v1047 = vmul.f32 %v843, %v1046
        %v1048 = vmul.f32 %v844, %v1046
        %v1049 = vmul.f32 %v847, %v1046
        %v1050 = vmul.f32 %v848, %v1046
        %v1051 = vmul.f32 %v851, %v1046
        %v1052 = vmul.f32 %v852, %v1046
        %v1053 = vmul.f32 %v855, %v1046
        %v1054 = vmul.f32 %v856, %v1046
        %v1055 = vmul.f32 %v859, %v1046
        %v1056 = vmul.f32 %v860, %v1046
        %v1057 = vmul.f32 %v863, %v1046
        %v1058 = vmul.f32 %v864, %v1046
        %v1059 = vmul.f32 %v867, %v1046
        %v1060 = vmul.f32 %v868, %v1046
        %v1061 = vmul.f32 %v871, %v1046
        %v1062 = vmul.f32 %v872, %v1046
        %v1063 = vadd.f32 %v1027, %v1047
        %v1064 = vadd.f32 %v1028, %v1048
        %v1065 = vadd.f32 %v1029, %v1049
        %v1066 = vadd.f32 %v1030, %v1050
        %v1067 = vadd.f32 %v1031, %v1051
        %v1068 = vadd.f32 %v1032, %v1052
        %v1069 = vadd.f32 %v1033, %v1053
        %v1070 = vadd.f32 %v1034, %v1054
        %v1071 = vadd.f32 %v1035, %v1055
        %v1072 = vadd.f32 %v1036, %v1056
        %v1073 = vadd.f32 %v1037, %v1057
        %v1074 = vadd.f32 %v1038, %v1058
        %v1075 = vadd.f32 %v1039, %v1059
        %v1076 = vadd.f32 %v1040, %v1060
        %v1077 = vadd.f32 %v1041, %v1061
        %v1078 = vadd.f32 %v1042, %v1062
        %v1079 = vlaneseq
        %v1080 = vshrl.u32 %v1079, 7
        %v1081 = vsub.s32 1, %v1080
        %v1082 = vrot.slane %v840, %v1081
        %v1083 = vmul.f32 %v847, %v1082
        %v1084 = vmul.f32 %v848, %v1082
        %v1085 = vmul.f32 %v851, %v1082
        %v1086 = vmul.f32 %v852, %v1082
        %v1087 = vmul.f32 %v855, %v1082
        %v1088 = vmul.f32 %v856, %v1082
        %v1089 = vmul.f32 %v859, %v1082
        %v1090 = vmul.f32 %v860, %v1082
        %v1091 = vmul.f32 %v863, %v1082
        %v1092 = vmul.f32 %v864, %v1082
        %v1093 = vmul.f32 %v867, %v1082
        %v1094 = vmul.f32 %v868, %v1082
        %v1095 = vmul.f32 %v871, %v1082
        %v1096 = vmul.f32 %v872, %v1082
        %v1097 = vmul.f32 %v875, %v1082
        %v1098 = vmul.f32 %v876, %v1082
        %v1099 = vadd.f32 %v1063, %v1083
        %v1100 = vadd.f32 %v1064, %v1084
        %v1101 = vadd.f32 %v1065, %v1085
        %v1102 = vadd.f32 %v1066, %v1086
        %v1103 = vadd.f32 %v1067, %v1087
        %v1104 = vadd.f32 %v1068, %v1088
        %v1105 = vadd.f32 %v1069, %v1089
        %v1106 = vadd.f32 %v1070, %v1090
        %v1107 = vadd.f32 %v1071, %v1091
        %v1108 = vadd.f32 %v1072, %v1092
        %v1109 = vadd.f32 %v1073, %v1093
        %v1110 = vadd.f32 %v1074, %v1094
        %v1111 = vadd.f32 %v1075, %v1095
        %v1112 = vadd.f32 %v1076, %v1096
        %v1113 = vadd.f32 %v1077, %v1097
        %v1114 = vadd.f32 %v1078, %v1098
        %v1115 = vlaneseq
        %v1116 = vshrl.u32 %v1115, 7
        %v1117 = vsub.s32 1, %v1116
        %v1118 = vrot.slane %v841, %v1117
        %v1119 = vmul.f32 %v851, %v1118
        %v1120 = vmul.f32 %v852, %v1118
        %v1121 = vmul.f32 %v855, %v1118
        %v1122 = vmul.f32 %v856, %v1118
        %v1123 = vmul.f32 %v859, %v1118
        %v1124 = vmul.f32 %v860, %v1118
        %v1125 = vmul.f32 %v863, %v1118
        %v1126 = vmul.f32 %v864, %v1118
        %v1127 = vmul.f32 %v867, %v1118
        %v1128 = vmul.f32 %v868, %v1118
        %v1129 = vmul.f32 %v871, %v1118
        %v1130 = vmul.f32 %v872, %v1118
        %v1131 = vmul.f32 %v875, %v1118
        %v1132 = vmul.f32 %v876, %v1118
        %v1133 = vmul.f32 %v879, %v1118
        %v1134 = vmul.f32 %v880, %v1118
        %v1135 = vadd.f32 %v1099, %v1119
        %v1136 = vadd.f32 %v1100, %v1120
        %v1137 = vadd.f32 %v1101, %v1121
        %v1138 = vadd.f32 %v1102, %v1122
        %v1139 = vadd.f32 %v1103, %v1123
        %v1140 = vadd.f32 %v1104, %v1124
        %v1141 = vadd.f32 %v1105, %v1125
        %v1142 = vadd.f32 %v1106, %v1126
        %v1143 = vadd.f32 %v1107, %v1127
        %v1144 = vadd.f32 %v1108, %v1128
        %v1145 = vadd.f32 %v1109, %v1129
        %v1146 = vadd.f32 %v1110, %v1130
        %v1147 = vadd.f32 %v1111, %v1131
        %v1148 = vadd.f32 %v1112, %v1132
        %v1149 = vadd.f32 %v1113, %v1133
        %v1150 = vadd.f32 %v1114, %v1134
        %v1151 = vrot.slane %v843, 1
        %v1152 = vrot.slane %v844, 1
        %v1153 = vrot.slane %v845, 1
        %v1154 = vrot.slane %v847, 1
        %v1155 = vrot.slane %v848, 1
        %v1156 = vrot.slane %v849, 1
        %v1157 = vrot.slane %v851, 1
        %v1158 = vrot.slane %v852, 1
        %v1159 = vrot.slane %v853, 1
        %v1160 = vrot.slane %v855, 1
        %v1161 = vrot.slane %v856, 1
        %v1162 = vrot.slane %v857, 1
        %v1163 = vrot.slane %v859, 1
        %v1164 = vrot.slane %v860, 1
        %v1165 = vrot.slane %v861, 1
        %v1166 = vrot.slane %v863, 1
        %v1167 = vrot.slane %v864, 1
        %v1168 = vrot.slane %v865, 1
        %v1169 = vrot.slane %v867, 1
        %v1170 = vrot.slane %v868, 1
        %v1171 = vrot.slane %v869, 1
        %v1172 = vrot.slane %v871, 1
        %v1173 = vrot.slane %v872, 1
        %v1174 = vrot.slane %v873, 1
        %v1175 = vrot.slane %v875, 1
        %v1176 = vrot.slane %v876, 1
        %v1177 = vrot.slane %v877, 1
        %v1178 = vrot.slane %v879, 1
        %v1179 = vrot.slane %v880, 1
        %v1180 = vrot.slane %v881, 1
        %vm1181 = vcmp.lt.s32.totalorder %v913, 7
        %v1182 = vsel %vm1181, %v1179, %v1180
        %v1183 = vsel %vm1181, %v1178, %v1179
        %v1184 = vsel %vm1181, %v1176, %v1177
        %v1185 = vsel %vm1181, %v1175, %v1176
        %v1186 = vsel %vm1181, %v1173, %v1174
        %v1187 = vsel %vm1181, %v1172, %v1173
        %v1188 = vsel %vm1181, %v1170, %v1171
        %v1189 = vsel %vm1181, %v1169, %v1170
        %v1190 = vsel %vm1181, %v1167, %v1168
        %v1191 = vsel %vm1181, %v1166, %v1167
        %v1192 = vsel %vm1181, %v1164, %v1165
        %v1193 = vsel %vm1181, %v1163, %v1164
        %v1194 = vsel %vm1181, %v1161, %v1162
        %v1195 = vsel %vm1181, %v1160, %v1161
        %v1196 = vsel %vm1181, %v1158, %v1159
        %v1197 = vsel %vm1181, %v1157, %v1158
        %v1198 = vsel %vm1181, %v1155, %v1156
        %v1199 = vsel %vm1181, %v1154, %v1155
        %v1200 = vsel %vm1181, %v1152, %v1153
        %v1201 = vsel %vm1181, %v1151, %v1152
        %v1202 = vlaneseq
        %v1203 = vshrl.u32 %v1202, 7
        %v1204 = vsub.s32 2, %v1203
        %v1205 = vrot.slane %v839, %v1204
        %v1206 = vmul.f32 %v1201, %v1205
        %v1207 = vmul.f32 %v1200, %v1205
        %v1208 = vmul.f32 %v1199, %v1205
        %v1209 = vmul.f32 %v1198, %v1205
        %v1210 = vmul.f32 %v1197, %v1205
        %v1211 = vmul.f32 %v1196, %v1205
        %v1212 = vmul.f32 %v1195, %v1205
        %v1213 = vmul.f32 %v1194, %v1205
        %v1214 = vmul.f32 %v1193, %v1205
        %v1215 = vmul.f32 %v1192, %v1205
        %v1216 = vmul.f32 %v1191, %v1205
        %v1217 = vmul.f32 %v1190, %v1205
        %v1218 = vmul.f32 %v1189, %v1205
        %v1219 = vmul.f32 %v1188, %v1205
        %v1220 = vmul.f32 %v1187, %v1205
        %v1221 = vmul.f32 %v1186, %v1205
        %v1222 = vadd.f32 %v1135, %v1206
        %v1223 = vadd.f32 %v1136, %v1207
        %v1224 = vadd.f32 %v1137, %v1208
        %v1225 = vadd.f32 %v1138, %v1209
        %v1226 = vadd.f32 %v1139, %v1210
        %v1227 = vadd.f32 %v1140, %v1211
        %v1228 = vadd.f32 %v1141, %v1212
        %v1229 = vadd.f32 %v1142, %v1213
        %v1230 = vadd.f32 %v1143, %v1214
        %v1231 = vadd.f32 %v1144, %v1215
        %v1232 = vadd.f32 %v1145, %v1216
        %v1233 = vadd.f32 %v1146, %v1217
        %v1234 = vadd.f32 %v1147, %v1218
        %v1235 = vadd.f32 %v1148, %v1219
        %v1236 = vadd.f32 %v1149, %v1220
        %v1237 = vadd.f32 %v1150, %v1221
        %v1238 = vlaneseq
        %v1239 = vshrl.u32 %v1238, 7
        %v1240 = vsub.s32 2, %v1239
        %v1241 = vrot.slane %v840, %v1240
        %v1242 = vmul.f32 %v1199, %v1241
        %v1243 = vmul.f32 %v1198, %v1241
        %v1244 = vmul.f32 %v1197, %v1241
        %v1245 = vmul.f32 %v1196, %v1241
        %v1246 = vmul.f32 %v1195, %v1241
        %v1247 = vmul.f32 %v1194, %v1241
        %v1248 = vmul.f32 %v1193, %v1241
        %v1249 = vmul.f32 %v1192, %v1241
        %v1250 = vmul.f32 %v1191, %v1241
        %v1251 = vmul.f32 %v1190, %v1241
        %v1252 = vmul.f32 %v1189, %v1241
        %v1253 = vmul.f32 %v1188, %v1241
        %v1254 = vmul.f32 %v1187, %v1241
        %v1255 = vmul.f32 %v1186, %v1241
        %v1256 = vmul.f32 %v1185, %v1241
        %v1257 = vmul.f32 %v1184, %v1241
        %v1258 = vadd.f32 %v1222, %v1242
        %v1259 = vadd.f32 %v1223, %v1243
        %v1260 = vadd.f32 %v1224, %v1244
        %v1261 = vadd.f32 %v1225, %v1245
        %v1262 = vadd.f32 %v1226, %v1246
        %v1263 = vadd.f32 %v1227, %v1247
        %v1264 = vadd.f32 %v1228, %v1248
        %v1265 = vadd.f32 %v1229, %v1249
        %v1266 = vadd.f32 %v1230, %v1250
        %v1267 = vadd.f32 %v1231, %v1251
        %v1268 = vadd.f32 %v1232, %v1252
        %v1269 = vadd.f32 %v1233, %v1253
        %v1270 = vadd.f32 %v1234, %v1254
        %v1271 = vadd.f32 %v1235, %v1255
        %v1272 = vadd.f32 %v1236, %v1256
        %v1273 = vadd.f32 %v1237, %v1257
        %v1274 = vlaneseq
        %v1275 = vshrl.u32 %v1274, 7
        %v1276 = vsub.s32 2, %v1275
        %v1277 = vrot.slane %v841, %v1276
        %v1278 = vmul.f32 %v1197, %v1277
        %v1279 = vmul.f32 %v1196, %v1277
        %v1280 = vmul.f32 %v1195, %v1277
        %v1281 = vmul.f32 %v1194, %v1277
        %v1282 = vmul.f32 %v1193, %v1277
        %v1283 = vmul.f32 %v1192, %v1277
        %v1284 = vmul.f32 %v1191, %v1277
        %v1285 = vmul.f32 %v1190, %v1277
        %v1286 = vmul.f32 %v1189, %v1277
        %v1287 = vmul.f32 %v1188, %v1277
        %v1288 = vmul.f32 %v1187, %v1277
        %v1289 = vmul.f32 %v1186, %v1277
        %v1290 = vmul.f32 %v1185, %v1277
        %v1291 = vmul.f32 %v1184, %v1277
        %v1292 = vmul.f32 %v1183, %v1277
        %v1293 = vmul.f32 %v1182, %v1277
        %v1294 = vadd.f32 %v1258, %v1278
        %v1295 = vadd.f32 %v1259, %v1279
        %v1296 = vadd.f32 %v1260, %v1280
        %v1297 = vadd.f32 %v1261, %v1281
        %v1298 = vadd.f32 %v1262, %v1282
        %v1299 = vadd.f32 %v1263, %v1283
        %v1300 = vadd.f32 %v1264, %v1284
        %v1301 = vadd.f32 %v1265, %v1285
        %v1302 = vadd.f32 %v1266, %v1286
        %v1303 = vadd.f32 %v1267, %v1287
        %v1304 = vadd.f32 %v1268, %v1288
        %v1305 = vadd.f32 %v1269, %v1289
        %v1306 = vadd.f32 %v1270, %v1290
        %v1307 = vadd.f32 %v1271, %v1291
        %v1308 = vadd.f32 %v1272, %v1292
        %v1309 = vadd.f32 %v1273, %v1293
        %1310 = vst.msk [vmem:[#allocation3] sm:$0xff] %vm764, %v1294
        %1311 = vst.msk [vmem:[#allocation3 + $0x8] sm:$0xff] %vm764, %v1295
        %1312 = vst.msk [vmem:[#allocation3 + $0x10] sm:$0xff] %vm764, %v1296
        %1313 = vst.msk [vmem:[#allocation3 + $0x18] sm:$0xff] %vm764, %v1297
        %1314 = vst.msk [vmem:[#allocation3 + $0x20] sm:$0xff] %vm764, %v1298
        %1315 = vst.msk [vmem:[#allocation3 + $0x28] sm:$0xff] %vm764, %v1299
        %1316 = vst.msk [vmem:[#allocation3 + $0x30] sm:$0xff] %vm764, %v1300
        %1317 = vst.msk [vmem:[#allocation3 + $0x38] sm:$0xff] %vm764, %v1301
        %1318 = vst.msk [vmem:[#allocation3 + $0x40] sm:$0xff] %vm764, %v1302
        %1319 = vst.msk [vmem:[#allocation3 + $0x48] sm:$0xff] %vm764, %v1303
        %1320 = vst.msk [vmem:[#allocation3 + $0x50] sm:$0xff] %vm764, %v1304
        %1321 = vst.msk [vmem:[#allocation3 + $0x58] sm:$0xff] %vm764, %v1305
        %1322 = vst.msk [vmem:[#allocation3 + $0x60] sm:$0xff] %vm764, %v1306
        %1323 = vst.msk [vmem:[#allocation3 + $0x68] sm:$0xff] %vm764, %v1307
        %1324 = vst.msk [vmem:[#allocation3 + $0x70] sm:$0xff] %vm764, %v1308
        %1325 = vst.msk [vmem:[#allocation3 + $0x78] sm:$0xff] %vm764, %v1309
        %s1326 = scalar_lea.vmem [#allocation2], 256
        %v1327 = vld [vmem:[%s1326] sm:$0xff]
        %v1328 = vld [vmem:[%s1326 + $0x8] sm:$0xff]
        %v1329 = vld [vmem:[%s1326 + $0x10] sm:$0xff]
        %v1330 = vld [vmem:[%s1326 + $0x18] sm:$0xff]
        %v1331 = vld [vmem:[%s1326 + $0x20] sm:$0xff]
        %v1332 = vld [vmem:[%s1326 + $0x28] sm:$0xff]
        %v1333 = vld [vmem:[%s1326 + $0x30] sm:$0xff]
        %v1334 = vld [vmem:[%s1326 + $0x38] sm:$0xff]
        %v1335 = vld [vmem:[%s1326 + $0x40] sm:$0xff]
        %v1336 = vld [vmem:[%s1326 + $0x48] sm:$0xff]
        %v1337 = vld [vmem:[%s1326 + $0x50] sm:$0xff]
        %v1338 = vld [vmem:[%s1326 + $0x58] sm:$0xff]
        %v1339 = vld [vmem:[%s1326 + $0x60] sm:$0xff]
        %v1340 = vld [vmem:[%s1326 + $0x68] sm:$0xff]
        %v1341 = vld [vmem:[%s1326 + $0x70] sm:$0xff]
        %v1342 = vld [vmem:[%s1326 + $0x78] sm:$0xff]
        %v1343 = vld [vmem:[%s1326 + $0x80] sm:$0xff]
        %v1344 = vld [vmem:[%s1326 + $0x88] sm:$0xff]
        %v1345 = vld [vmem:[%s1326 + $0x90] sm:$0xff]
        %v1346 = vld [vmem:[%s1326 + $0x98] sm:$0xff]
        %v1347 = vld [vmem:[%s1326 + $0xa0] sm:$0xff]
        %v1348 = vld [vmem:[%s1326 + $0xa8] sm:$0xff]
        %v1349 = vld [vmem:[%s1326 + $0xb0] sm:$0xff]
        %v1350 = vld [vmem:[%s1326 + $0xb8] sm:$0xff]
        %v1351 = vld [vmem:[%s1326 + $0xc0] sm:$0xff]
        %v1352 = vld [vmem:[%s1326 + $0xc8] sm:$0xff]
        %v1353 = vld [vmem:[%s1326 + $0xd0] sm:$0xff]
        %v1354 = vld [vmem:[%s1326 + $0xd8] sm:$0xff]
        %v1355 = vld [vmem:[%s1326 + $0xe0] sm:$0xff]
        %v1356 = vld [vmem:[%s1326 + $0xe8] sm:$0xff]
        %v1357 = vld [vmem:[%s1326 + $0xf0] sm:$0xff]
        %v1358 = vld [vmem:[%s1326 + $0xf8] sm:$0xff]
        %v1359 = vld [vmem:[%s1326 + $0x100] sm:$0xff]
        %v1360 = vld [vmem:[%s1326 + $0x108] sm:$0xff]
        %v1361 = vld [vmem:[%s1326 + $0x110] sm:$0xff]
        %v1362 = vld [vmem:[%s1326 + $0x118] sm:$0xff]
        %v1363 = vld [vmem:[%s1326 + $0x120] sm:$0xff]
        %v1364 = vld [vmem:[%s1326 + $0x128] sm:$0xff]
        %v1365 = vld [vmem:[%s1326 + $0x130] sm:$0xff]
        %v1366 = vld [vmem:[%s1326 + $0x138] sm:$0xff]
        %v1367 = vrot.slane %v1327, 7
        %v1368 = vrot.slane %v1328, 7
        %v1369 = vrot.slane %v1329, 7
        %v1370 = vrot.slane %v1331, 7
        %v1371 = vrot.slane %v1332, 7
        %v1372 = vrot.slane %v1333, 7
        %v1373 = vrot.slane %v1335, 7
        %v1374 = vrot.slane %v1336, 7
        %v1375 = vrot.slane %v1337, 7
        %v1376 = vrot.slane %v1339, 7
        %v1377 = vrot.slane %v1340, 7
        %v1378 = vrot.slane %v1341, 7
        %v1379 = vrot.slane %v1343, 7
        %v1380 = vrot.slane %v1344, 7
        %v1381 = vrot.slane %v1345, 7
        %v1382 = vrot.slane %v1347, 7
        %v1383 = vrot.slane %v1348, 7
        %v1384 = vrot.slane %v1349, 7
        %v1385 = vrot.slane %v1351, 7
        %v1386 = vrot.slane %v1352, 7
        %v1387 = vrot.slane %v1353, 7
        %v1388 = vrot.slane %v1355, 7
        %v1389 = vrot.slane %v1356, 7
        %v1390 = vrot.slane %v1357, 7
        %v1391 = vrot.slane %v1359, 7
        %v1392 = vrot.slane %v1360, 7
        %v1393 = vrot.slane %v1361, 7
        %v1394 = vrot.slane %v1363, 7
        %v1395 = vrot.slane %v1364, 7
        %v1396 = vrot.slane %v1365, 7
        %v1397 = vsel %vm914, %v1395, %v1396
        %v1398 = vsel %vm914, %v1394, %v1395
        %v1399 = vsel %vm914, %v1392, %v1393
        %v1400 = vsel %vm914, %v1391, %v1392
        %v1401 = vsel %vm914, %v1389, %v1390
        %v1402 = vsel %vm914, %v1388, %v1389
        %v1403 = vsel %vm914, %v1386, %v1387
        %v1404 = vsel %vm914, %v1385, %v1386
        %v1405 = vsel %vm914, %v1383, %v1384
        %v1406 = vsel %vm914, %v1382, %v1383
        %v1407 = vsel %vm914, %v1380, %v1381
        %v1408 = vsel %vm914, %v1379, %v1380
        %v1409 = vsel %vm914, %v1377, %v1378
        %v1410 = vsel %vm914, %v1376, %v1377
        %v1411 = vsel %vm914, %v1374, %v1375
        %v1412 = vsel %vm914, %v1373, %v1374
        %v1413 = vsel %vm914, %v1371, %v1372
        %v1414 = vsel %vm914, %v1370, %v1371
        %v1415 = vsel %vm914, %v1368, %v1369
        %v1416 = vsel %vm914, %v1367, %v1368
        %v1417 = vmul.f32 %v1416, %v938
        %v1418 = vmul.f32 %v1415, %v938
        %v1419 = vmul.f32 %v1414, %v938
        %v1420 = vmul.f32 %v1413, %v938
        %v1421 = vmul.f32 %v1412, %v938
        %v1422 = vmul.f32 %v1411, %v938
        %v1423 = vmul.f32 %v1410, %v938
        %v1424 = vmul.f32 %v1409, %v938
        %v1425 = vmul.f32 %v1408, %v938
        %v1426 = vmul.f32 %v1407, %v938
        %v1427 = vmul.f32 %v1406, %v938
        %v1428 = vmul.f32 %v1405, %v938
        %v1429 = vmul.f32 %v1404, %v938
        %v1430 = vmul.f32 %v1403, %v938
        %v1431 = vmul.f32 %v1402, %v938
        %v1432 = vmul.f32 %v1401, %v938
        %v1433 = vadd.f32 %v1417, 0.0
        %v1434 = vadd.f32 %v1418, 0.0
        %v1435 = vadd.f32 %v1419, 0.0
        %v1436 = vadd.f32 %v1420, 0.0
        %v1437 = vadd.f32 %v1421, 0.0
        %v1438 = vadd.f32 %v1422, 0.0
        %v1439 = vadd.f32 %v1423, 0.0
        %v1440 = vadd.f32 %v1424, 0.0
        %v1441 = vadd.f32 %v1425, 0.0
        %v1442 = vadd.f32 %v1426, 0.0
        %v1443 = vadd.f32 %v1427, 0.0
        %v1444 = vadd.f32 %v1428, 0.0
        %v1445 = vadd.f32 %v1429, 0.0
        %v1446 = vadd.f32 %v1430, 0.0
        %v1447 = vadd.f32 %v1431, 0.0
        %v1448 = vadd.f32 %v1432, 0.0
        %v1449 = vmul.f32 %v1414, %v974
        %v1450 = vmul.f32 %v1413, %v974
        %v1451 = vmul.f32 %v1412, %v974
        %v1452 = vmul.f32 %v1411, %v974
        %v1453 = vmul.f32 %v1410, %v974
        %v1454 = vmul.f32 %v1409, %v974
        %v1455 = vmul.f32 %v1408, %v974
        %v1456 = vmul.f32 %v1407, %v974
        %v1457 = vmul.f32 %v1406, %v974
        %v1458 = vmul.f32 %v1405, %v974
        %v1459 = vmul.f32 %v1404, %v974
        %v1460 = vmul.f32 %v1403, %v974
        %v1461 = vmul.f32 %v1402, %v974
        %v1462 = vmul.f32 %v1401, %v974
        %v1463 = vmul.f32 %v1400, %v974
        %v1464 = vmul.f32 %v1399, %v974
        %v1465 = vadd.f32 %v1433, %v1449
        %v1466 = vadd.f32 %v1434, %v1450
        %v1467 = vadd.f32 %v1435, %v1451
        %v1468 = vadd.f32 %v1436, %v1452
        %v1469 = vadd.f32 %v1437, %v1453
        %v1470 = vadd.f32 %v1438, %v1454
        %v1471 = vadd.f32 %v1439, %v1455
        %v1472 = vadd.f32 %v1440, %v1456
        %v1473 = vadd.f32 %v1441, %v1457
        %v1474 = vadd.f32 %v1442, %v1458
        %v1475 = vadd.f32 %v1443, %v1459
        %v1476 = vadd.f32 %v1444, %v1460
        %v1477 = vadd.f32 %v1445, %v1461
        %v1478 = vadd.f32 %v1446, %v1462
        %v1479 = vadd.f32 %v1447, %v1463
        %v1480 = vadd.f32 %v1448, %v1464
        %v1481 = vmul.f32 %v1412, %v1010
        %v1482 = vmul.f32 %v1411, %v1010
        %v1483 = vmul.f32 %v1410, %v1010
        %v1484 = vmul.f32 %v1409, %v1010
        %v1485 = vmul.f32 %v1408, %v1010
        %v1486 = vmul.f32 %v1407, %v1010
        %v1487 = vmul.f32 %v1406, %v1010
        %v1488 = vmul.f32 %v1405, %v1010
        %v1489 = vmul.f32 %v1404, %v1010
        %v1490 = vmul.f32 %v1403, %v1010
        %v1491 = vmul.f32 %v1402, %v1010
        %v1492 = vmul.f32 %v1401, %v1010
        %v1493 = vmul.f32 %v1400, %v1010
        %v1494 = vmul.f32 %v1399, %v1010
        %v1495 = vmul.f32 %v1398, %v1010
        %v1496 = vmul.f32 %v1397, %v1010
        %v1497 = vadd.f32 %v1465, %v1481
        %v1498 = vadd.f32 %v1466, %v1482
        %v1499 = vadd.f32 %v1467, %v1483
        %v1500 = vadd.f32 %v1468, %v1484
        %v1501 = vadd.f32 %v1469, %v1485
        %v1502 = vadd.f32 %v1470, %v1486
        %v1503 = vadd.f32 %v1471, %v1487
        %v1504 = vadd.f32 %v1472, %v1488
        %v1505 = vadd.f32 %v1473, %v1489
        %v1506 = vadd.f32 %v1474, %v1490
        %v1507 = vadd.f32 %v1475, %v1491
        %v1508 = vadd.f32 %v1476, %v1492
        %v1509 = vadd.f32 %v1477, %v1493
        %v1510 = vadd.f32 %v1478, %v1494
        %v1511 = vadd.f32 %v1479, %v1495
        %v1512 = vadd.f32 %v1480, %v1496
        %v1513 = vmul.f32 %v1328, %v1046
        %v1514 = vmul.f32 %v1329, %v1046
        %v1515 = vmul.f32 %v1332, %v1046
        %v1516 = vmul.f32 %v1333, %v1046
        %v1517 = vmul.f32 %v1336, %v1046
        %v1518 = vmul.f32 %v1337, %v1046
        %v1519 = vmul.f32 %v1340, %v1046
        %v1520 = vmul.f32 %v1341, %v1046
        %v1521 = vmul.f32 %v1344, %v1046
        %v1522 = vmul.f32 %v1345, %v1046
        %v1523 = vmul.f32 %v1348, %v1046
        %v1524 = vmul.f32 %v1349, %v1046
        %v1525 = vmul.f32 %v1352, %v1046
        %v1526 = vmul.f32 %v1353, %v1046
        %v1527 = vmul.f32 %v1356, %v1046
        %v1528 = vmul.f32 %v1357, %v1046
        %v1529 = vadd.f32 %v1497, %v1513
        %v1530 = vadd.f32 %v1498, %v1514
        %v1531 = vadd.f32 %v1499, %v1515
        %v1532 = vadd.f32 %v1500, %v1516
        %v1533 = vadd.f32 %v1501, %v1517
        %v1534 = vadd.f32 %v1502, %v1518
        %v1535 = vadd.f32 %v1503, %v1519
        %v1536 = vadd.f32 %v1504, %v1520
        %v1537 = vadd.f32 %v1505, %v1521
        %v1538 = vadd.f32 %v1506, %v1522
        %v1539 = vadd.f32 %v1507, %v1523
        %v1540 = vadd.f32 %v1508, %v1524
        %v1541 = vadd.f32 %v1509, %v1525
        %v1542 = vadd.f32 %v1510, %v1526
        %v1543 = vadd.f32 %v1511, %v1527
        %v1544 = vadd.f32 %v1512, %v1528
        %v1545 = vmul.f32 %v1332, %v1082
        %v1546 = vmul.f32 %v1333, %v1082
        %v1547 = vmul.f32 %v1336, %v1082
        %v1548 = vmul.f32 %v1337, %v1082
        %v1549 = vmul.f32 %v1340, %v1082
        %v1550 = vmul.f32 %v1341, %v1082
        %v1551 = vmul.f32 %v1344, %v1082
        %v1552 = vmul.f32 %v1345, %v1082
        %v1553 = vmul.f32 %v1348, %v1082
        %v1554 = vmul.f32 %v1349, %v1082
        %v1555 = vmul.f32 %v1352, %v1082
        %v1556 = vmul.f32 %v1353, %v1082
        %v1557 = vmul.f32 %v1356, %v1082
        %v1558 = vmul.f32 %v1357, %v1082
        %v1559 = vmul.f32 %v1360, %v1082
        %v1560 = vmul.f32 %v1361, %v1082
        %v1561 = vadd.f32 %v1529, %v1545
        %v1562 = vadd.f32 %v1530, %v1546
        %v1563 = vadd.f32 %v1531, %v1547
        %v1564 = vadd.f32 %v1532, %v1548
        %v1565 = vadd.f32 %v1533, %v1549
        %v1566 = vadd.f32 %v1534, %v1550
        %v1567 = vadd.f32 %v1535, %v1551
        %v1568 = vadd.f32 %v1536, %v1552
        %v1569 = vadd.f32 %v1537, %v1553
        %v1570 = vadd.f32 %v1538, %v1554
        %v1571 = vadd.f32 %v1539, %v1555
        %v1572 = vadd.f32 %v1540, %v1556
        %v1573 = vadd.f32 %v1541, %v1557
        %v1574 = vadd.f32 %v1542, %v1558
        %v1575 = vadd.f32 %v1543, %v1559
        %v1576 = vadd.f32 %v1544, %v1560
        %v1577 = vmul.f32 %v1336, %v1118
        %v1578 = vmul.f32 %v1337, %v1118
        %v1579 = vmul.f32 %v1340, %v1118
        %v1580 = vmul.f32 %v1341, %v1118
        %v1581 = vmul.f32 %v1344, %v1118
        %v1582 = vmul.f32 %v1345, %v1118
        %v1583 = vmul.f32 %v1348, %v1118
        %v1584 = vmul.f32 %v1349, %v1118
        %v1585 = vmul.f32 %v1352, %v1118
        %v1586 = vmul.f32 %v1353, %v1118
        %v1587 = vmul.f32 %v1356, %v1118
        %v1588 = vmul.f32 %v1357, %v1118
        %v1589 = vmul.f32 %v1360, %v1118
        %v1590 = vmul.f32 %v1361, %v1118
        %v1591 = vmul.f32 %v1364, %v1118
        %v1592 = vmul.f32 %v1365, %v1118
        %v1593 = vadd.f32 %v1561, %v1577
        %v1594 = vadd.f32 %v1562, %v1578
        %v1595 = vadd.f32 %v1563, %v1579
        %v1596 = vadd.f32 %v1564, %v1580
        %v1597 = vadd.f32 %v1565, %v1581
        %v1598 = vadd.f32 %v1566, %v1582
        %v1599 = vadd.f32 %v1567, %v1583
        %v1600 = vadd.f32 %v1568, %v1584
        %v1601 = vadd.f32 %v1569, %v1585
        %v1602 = vadd.f32 %v1570, %v1586
        %v1603 = vadd.f32 %v1571, %v1587
        %v1604 = vadd.f32 %v1572, %v1588
        %v1605 = vadd.f32 %v1573, %v1589
        %v1606 = vadd.f32 %v1574, %v1590
        %v1607 = vadd.f32 %v1575, %v1591
        %v1608 = vadd.f32 %v1576, %v1592
        %v1609 = vrot.slane %v1328, 1
        %v1610 = vrot.slane %v1329, 1
        %v1611 = vrot.slane %v1330, 1
        %v1612 = vrot.slane %v1332, 1
        %v1613 = vrot.slane %v1333, 1
        %v1614 = vrot.slane %v1334, 1
        %v1615 = vrot.slane %v1336, 1
        %v1616 = vrot.slane %v1337, 1
        %v1617 = vrot.slane %v1338, 1
        %v1618 = vrot.slane %v1340, 1
        %v1619 = vrot.slane %v1341, 1
        %v1620 = vrot.slane %v1342, 1
        %v1621 = vrot.slane %v1344, 1
        %v1622 = vrot.slane %v1345, 1
        %v1623 = vrot.slane %v1346, 1
        %v1624 = vrot.slane %v1348, 1
        %v1625 = vrot.slane %v1349, 1
        %v1626 = vrot.slane %v1350, 1
        %v1627 = vrot.slane %v1352, 1
        %v1628 = vrot.slane %v1353, 1
        %v1629 = vrot.slane %v1354, 1
        %v1630 = vrot.slane %v1356, 1
        %v1631 = vrot.slane %v1357, 1
        %v1632 = vrot.slane %v1358, 1
        %v1633 = vrot.slane %v1360, 1
        %v1634 = vrot.slane %v1361, 1
        %v1635 = vrot.slane %v1362, 1
        %v1636 = vrot.slane %v1364, 1
        %v1637 = vrot.slane %v1365, 1
        %v1638 = vrot.slane %v1366, 1
        %v1639 = vsel %vm1181, %v1637, %v1638
        %v1640 = vsel %vm1181, %v1636, %v1637
        %v1641 = vsel %vm1181, %v1634, %v1635
        %v1642 = vsel %vm1181, %v1633, %v1634
        %v1643 = vsel %vm1181, %v1631, %v1632
        %v1644 = vsel %vm1181, %v1630, %v1631
        %v1645 = vsel %vm1181, %v1628, %v1629
        %v1646 = vsel %vm1181, %v1627, %v1628
        %v1647 = vsel %vm1181, %v1625, %v1626
        %v1648 = vsel %vm1181, %v1624, %v1625
        %v1649 = vsel %vm1181, %v1622, %v1623
        %v1650 = vsel %vm1181, %v1621, %v1622
        %v1651 = vsel %vm1181, %v1619, %v1620
        %v1652 = vsel %vm1181, %v1618, %v1619
        %v1653 = vsel %vm1181, %v1616, %v1617
        %v1654 = vsel %vm1181, %v1615, %v1616
        %v1655 = vsel %vm1181, %v1613, %v1614
        %v1656 = vsel %vm1181, %v1612, %v1613
        %v1657 = vsel %vm1181, %v1610, %v1611
        %v1658 = vsel %vm1181, %v1609, %v1610
        %v1659 = vmul.f32 %v1658, %v1205
        %v1660 = vmul.f32 %v1657, %v1205
        %v1661 = vmul.f32 %v1656, %v1205
        %v1662 = vmul.f32 %v1655, %v1205
        %v1663 = vmul.f32 %v1654, %v1205
        %v1664 = vmul.f32 %v1653, %v1205
        %v1665 = vmul.f32 %v1652, %v1205
        %v1666 = vmul.f32 %v1651, %v1205
        %v1667 = vmul.f32 %v1650, %v1205
        %v1668 = vmul.f32 %v1649, %v1205
        %v1669 = vmul.f32 %v1648, %v1205
        %v1670 = vmul.f32 %v1647, %v1205
        %v1671 = vmul.f32 %v1646, %v1205
        %v1672 = vmul.f32 %v1645, %v1205
        %v1673 = vmul.f32 %v1644, %v1205
        %v1674 = vmul.f32 %v1643, %v1205
        %v1675 = vadd.f32 %v1593, %v1659
        %v1676 = vadd.f32 %v1594, %v1660
        %v1677 = vadd.f32 %v1595, %v1661
        %v1678 = vadd.f32 %v1596, %v1662
        %v1679 = vadd.f32 %v1597, %v1663
        %v1680 = vadd.f32 %v1598, %v1664
        %v1681 = vadd.f32 %v1599, %v1665
        %v1682 = vadd.f32 %v1600, %v1666
        %v1683 = vadd.f32 %v1601, %v1667
        %v1684 = vadd.f32 %v1602, %v1668
        %v1685 = vadd.f32 %v1603, %v1669
        %v1686 = vadd.f32 %v1604, %v1670
        %v1687 = vadd.f32 %v1605, %v1671
        %v1688 = vadd.f32 %v1606, %v1672
        %v1689 = vadd.f32 %v1607, %v1673
        %v1690 = vadd.f32 %v1608, %v1674
        %v1691 = vmul.f32 %v1656, %v1241
        %v1692 = vmul.f32 %v1655, %v1241
        %v1693 = vmul.f32 %v1654, %v1241
        %v1694 = vmul.f32 %v1653, %v1241
        %v1695 = vmul.f32 %v1652, %v1241
        %v1696 = vmul.f32 %v1651, %v1241
        %v1697 = vmul.f32 %v1650, %v1241
        %v1698 = vmul.f32 %v1649, %v1241
        %v1699 = vmul.f32 %v1648, %v1241
        %v1700 = vmul.f32 %v1647, %v1241
        %v1701 = vmul.f32 %v1646, %v1241
        %v1702 = vmul.f32 %v1645, %v1241
        %v1703 = vmul.f32 %v1644, %v1241
        %v1704 = vmul.f32 %v1643, %v1241
        %v1705 = vmul.f32 %v1642, %v1241
        %v1706 = vmul.f32 %v1641, %v1241
        %v1707 = vadd.f32 %v1675, %v1691
        %v1708 = vadd.f32 %v1676, %v1692
        %v1709 = vadd.f32 %v1677, %v1693
        %v1710 = vadd.f32 %v1678, %v1694
        %v1711 = vadd.f32 %v1679, %v1695
        %v1712 = vadd.f32 %v1680, %v1696
        %v1713 = vadd.f32 %v1681, %v1697
        %v1714 = vadd.f32 %v1682, %v1698
        %v1715 = vadd.f32 %v1683, %v1699
        %v1716 = vadd.f32 %v1684, %v1700
        %v1717 = vadd.f32 %v1685, %v1701
        %v1718 = vadd.f32 %v1686, %v1702
        %v1719 = vadd.f32 %v1687, %v1703
        %v1720 = vadd.f32 %v1688, %v1704
        %v1721 = vadd.f32 %v1689, %v1705
        %v1722 = vadd.f32 %v1690, %v1706
        %v1723 = vmul.f32 %v1654, %v1277
        %v1724 = vmul.f32 %v1653, %v1277
        %v1725 = vmul.f32 %v1652, %v1277
        %v1726 = vmul.f32 %v1651, %v1277
        %v1727 = vmul.f32 %v1650, %v1277
        %v1728 = vmul.f32 %v1649, %v1277
        %v1729 = vmul.f32 %v1648, %v1277
        %v1730 = vmul.f32 %v1647, %v1277
        %v1731 = vmul.f32 %v1646, %v1277
        %v1732 = vmul.f32 %v1645, %v1277
        %v1733 = vmul.f32 %v1644, %v1277
        %v1734 = vmul.f32 %v1643, %v1277
        %v1735 = vmul.f32 %v1642, %v1277
        %v1736 = vmul.f32 %v1641, %v1277
        %v1737 = vmul.f32 %v1640, %v1277
        %v1738 = vmul.f32 %v1639, %v1277
        %v1739 = vadd.f32 %v1707, %v1723
        %v1740 = vadd.f32 %v1708, %v1724
        %v1741 = vadd.f32 %v1709, %v1725
        %v1742 = vadd.f32 %v1710, %v1726
        %v1743 = vadd.f32 %v1711, %v1727
        %v1744 = vadd.f32 %v1712, %v1728
        %v1745 = vadd.f32 %v1713, %v1729
        %v1746 = vadd.f32 %v1714, %v1730
        %v1747 = vadd.f32 %v1715, %v1731
        %v1748 = vadd.f32 %v1716, %v1732
        %v1749 = vadd.f32 %v1717, %v1733
        %v1750 = vadd.f32 %v1718, %v1734
        %v1751 = vadd.f32 %v1719, %v1735
        %v1752 = vadd.f32 %v1720, %v1736
        %v1753 = vadd.f32 %v1721, %v1737
        %v1754 = vadd.f32 %v1722, %v1738
        %1755 = vst.msk [vmem:[#allocation3 + $0x80] sm:$0xff] %vm764, %v1739
        %1756 = vst.msk [vmem:[#allocation3 + $0x88] sm:$0xff] %vm764, %v1740
        %1757 = vst.msk [vmem:[#allocation3 + $0x90] sm:$0xff] %vm764, %v1741
        %1758 = vst.msk [vmem:[#allocation3 + $0x98] sm:$0xff] %vm764, %v1742
        %1759 = vst.msk [vmem:[#allocation3 + $0xa0] sm:$0xff] %vm764, %v1743
        %1760 = vst.msk [vmem:[#allocation3 + $0xa8] sm:$0xff] %vm764, %v1744
        %1761 = vst.msk [vmem:[#allocation3 + $0xb0] sm:$0xff] %vm764, %v1745
        %1762 = vst.msk [vmem:[#allocation3 + $0xb8] sm:$0xff] %vm764, %v1746
        %1763 = vst.msk [vmem:[#allocation3 + $0xc0] sm:$0xff] %vm764, %v1747
        %1764 = vst.msk [vmem:[#allocation3 + $0xc8] sm:$0xff] %vm764, %v1748
        %1765 = vst.msk [vmem:[#allocation3 + $0xd0] sm:$0xff] %vm764, %v1749
        %1766 = vst.msk [vmem:[#allocation3 + $0xd8] sm:$0xff] %vm764, %v1750
        %1767 = vst.msk [vmem:[#allocation3 + $0xe0] sm:$0xff] %vm764, %v1751
        %1768 = vst.msk [vmem:[#allocation3 + $0xe8] sm:$0xff] %vm764, %v1752
        %1769 = vst.msk [vmem:[#allocation3 + $0xf0] sm:$0xff] %vm764, %v1753
        %1770 = vst.msk [vmem:[#allocation3 + $0xf8] sm:$0xff] %vm764, %v1754
        %v1771 = vld [vmem:[#allocation3] sm:$0xff]
        %v1772 = vld [vmem:[#allocation3 + $0x8] sm:$0xff]
        %v1773 = vld [vmem:[#allocation3 + $0x10] sm:$0xff]
        %v1774 = vld [vmem:[#allocation3 + $0x18] sm:$0xff]
        %v1775 = vld [vmem:[#allocation3 + $0x20] sm:$0xff]
        %v1776 = vld [vmem:[#allocation3 + $0x28] sm:$0xff]
        %v1777 = vld [vmem:[#allocation3 + $0x30] sm:$0xff]
        %v1778 = vld [vmem:[#allocation3 + $0x38] sm:$0xff]
        %v1779 = vld [vmem:[#allocation3 + $0x40] sm:$0xff]
        %v1780 = vld [vmem:[#allocation3 + $0x48] sm:$0xff]
        %v1781 = vld [vmem:[#allocation3 + $0x50] sm:$0xff]
        %v1782 = vld [vmem:[#allocation3 + $0x58] sm:$0xff]
        %v1783 = vld [vmem:[#allocation3 + $0x60] sm:$0xff]
        %v1784 = vld [vmem:[#allocation3 + $0x68] sm:$0xff]
        %v1785 = vld [vmem:[#allocation3 + $0x70] sm:$0xff]
        %v1786 = vld [vmem:[#allocation3 + $0x78] sm:$0xff]
        %v1787 = vld [vmem:[#allocation3 + $0x80] sm:$0xff]
        %v1788 = vld [vmem:[#allocation3 + $0x88] sm:$0xff]
        %v1789 = vld [vmem:[#allocation3 + $0x90] sm:$0xff]
        %v1790 = vld [vmem:[#allocation3 + $0x98] sm:$0xff]
        %v1791 = vld [vmem:[#allocation3 + $0xa0] sm:$0xff]
        %v1792 = vld [vmem:[#allocation3 + $0xa8] sm:$0xff]
        %v1793 = vld [vmem:[#allocation3 + $0xb0] sm:$0xff]
        %v1794 = vld [vmem:[#allocation3 + $0xb8] sm:$0xff]
        %v1795 = vld [vmem:[#allocation3 + $0xc0] sm:$0xff]
        %v1796 = vld [vmem:[#allocation3 + $0xc8] sm:$0xff]
        %v1797 = vld [vmem:[#allocation3 + $0xd0] sm:$0xff]
        %v1798 = vld [vmem:[#allocation3 + $0xd8] sm:$0xff]
        %v1799 = vld [vmem:[#allocation3 + $0xe0] sm:$0xff]
        %v1800 = vld [vmem:[#allocation3 + $0xe8] sm:$0xff]
        %v1801 = vld [vmem:[#allocation3 + $0xf0] sm:$0xff]
        %v1802 = vld [vmem:[#allocation3 + $0xf8] sm:$0xff]
        %v1803 = vld [vmem:[#allocation10] sm:$0x1]
        %v1804 = vlaneseq
        %v1805 = vshrl.u32 %v1804, 7
        %v1806 = vsub.s32 0, %v1805
        %v1807 = vrot.slane %v1803, %v1806
        %v1808 = vmul.f32 %v1771, %v1807
        %v1809 = vmul.f32 %v1772, %v1807
        %v1810 = vmul.f32 %v1773, %v1807
        %v1811 = vmul.f32 %v1774, %v1807
        %v1812 = vmul.f32 %v1775, %v1807
        %v1813 = vmul.f32 %v1776, %v1807
        %v1814 = vmul.f32 %v1777, %v1807
        %v1815 = vmul.f32 %v1778, %v1807
        %v1816 = vmul.f32 %v1779, %v1807
        %v1817 = vmul.f32 %v1780, %v1807
        %v1818 = vmul.f32 %v1781, %v1807
        %v1819 = vmul.f32 %v1782, %v1807
        %v1820 = vmul.f32 %v1783, %v1807
        %v1821 = vmul.f32 %v1784, %v1807
        %v1822 = vmul.f32 %v1785, %v1807
        %v1823 = vmul.f32 %v1786, %v1807
        %v1824 = vmul.f32 %v1787, %v1807
        %v1825 = vmul.f32 %v1788, %v1807
        %v1826 = vmul.f32 %v1789, %v1807
        %v1827 = vmul.f32 %v1790, %v1807
        %v1828 = vmul.f32 %v1791, %v1807
        %v1829 = vmul.f32 %v1792, %v1807
        %v1830 = vmul.f32 %v1793, %v1807
        %v1831 = vmul.f32 %v1794, %v1807
        %v1832 = vmul.f32 %v1795, %v1807
        %v1833 = vmul.f32 %v1796, %v1807
        %v1834 = vmul.f32 %v1797, %v1807
        %v1835 = vmul.f32 %v1798, %v1807
        %v1836 = vmul.f32 %v1799, %v1807
        %v1837 = vmul.f32 %v1800, %v1807
        %v1838 = vmul.f32 %v1801, %v1807
        %v1839 = vmul.f32 %v1802, %v1807
        %v1840 = vld [vmem:[#allocation10 + $0x1] sm:$0x1]
        %v1841 = vlaneseq
        %v1842 = vshrl.u32 %v1841, 7
        %v1843 = vsub.s32 0, %v1842
        %v1844 = vrot.slane %v1840, %v1843
        %v1845 = vadd.f32 %v1808, %v1844
        %v1846 = vadd.f32 %v1809, %v1844
        %v1847 = vadd.f32 %v1810, %v1844
        %v1848 = vadd.f32 %v1811, %v1844
        %v1849 = vadd.f32 %v1812, %v1844
        %v1850 = vadd.f32 %v1813, %v1844
        %v1851 = vadd.f32 %v1814, %v1844
        %v1852 = vadd.f32 %v1815, %v1844
        %v1853 = vadd.f32 %v1816, %v1844
        %v1854 = vadd.f32 %v1817, %v1844
        %v1855 = vadd.f32 %v1818, %v1844
        %v1856 = vadd.f32 %v1819, %v1844
        %v1857 = vadd.f32 %v1820, %v1844
        %v1858 = vadd.f32 %v1821, %v1844
        %v1859 = vadd.f32 %v1822, %v1844
        %v1860 = vadd.f32 %v1823, %v1844
        %v1861 = vadd.f32 %v1824, %v1844
        %v1862 = vadd.f32 %v1825, %v1844
        %v1863 = vadd.f32 %v1826, %v1844
        %v1864 = vadd.f32 %v1827, %v1844
        %v1865 = vadd.f32 %v1828, %v1844
        %v1866 = vadd.f32 %v1829, %v1844
        %v1867 = vadd.f32 %v1830, %v1844
        %v1868 = vadd.f32 %v1831, %v1844
        %v1869 = vadd.f32 %v1832, %v1844
        %v1870 = vadd.f32 %v1833, %v1844
        %v1871 = vadd.f32 %v1834, %v1844
        %v1872 = vadd.f32 %v1835, %v1844
        %v1873 = vadd.f32 %v1836, %v1844
        %v1874 = vadd.f32 %v1837, %v1844
        %v1875 = vadd.f32 %v1838, %v1844
        %v1876 = vadd.f32 %v1839, %v1844
        %v1877 = vsel %vm764, %v1845, 0.0
        %v1878 = vsel %vm764, %v1846, 0.0
        %v1879 = vadd.f32 %v1877, %v1878
        %v1880 = vsel %vm764, %v1847, 0.0
        %v1881 = vadd.f32 %v1879, %v1880
        %v1882 = vsel %vm764, %v1848, 0.0
        %v1883 = vadd.f32 %v1881, %v1882
        %v1884 = vsel %vm764, %v1849, 0.0
        %v1885 = vadd.f32 %v1883, %v1884
        %v1886 = vsel %vm764, %v1850, 0.0
        %v1887 = vadd.f32 %v1885, %v1886
        %v1888 = vsel %vm764, %v1851, 0.0
        %v1889 = vadd.f32 %v1887, %v1888
        %v1890 = vsel %vm764, %v1852, 0.0
        %v1891 = vadd.f32 %v1889, %v1890
        %v1892 = vsel %vm764, %v1853, 0.0
        %v1893 = vadd.f32 %v1891, %v1892
        %v1894 = vsel %vm764, %v1854, 0.0
        %v1895 = vadd.f32 %v1893, %v1894
        %v1896 = vsel %vm764, %v1855, 0.0
        %v1897 = vadd.f32 %v1895, %v1896
        %v1898 = vsel %vm764, %v1856, 0.0
        %v1899 = vadd.f32 %v1897, %v1898
        %v1900 = vsel %vm764, %v1857, 0.0
        %v1901 = vadd.f32 %v1899, %v1900
        %v1902 = vsel %vm764, %v1858, 0.0
        %v1903 = vadd.f32 %v1901, %v1902
        %v1904 = vsel %vm764, %v1859, 0.0
        %v1905 = vadd.f32 %v1903, %v1904
        %v1906 = vsel %vm764, %v1860, 0.0
        %v1907 = vadd.f32 %v1905, %v1906
        %v1908 = vsel %vm764, %v1861, 0.0
        %v1909 = vadd.f32 %v1907, %v1908
        %v1910 = vsel %vm764, %v1862, 0.0
        %v1911 = vadd.f32 %v1909, %v1910
        %v1912 = vsel %vm764, %v1863, 0.0
        %v1913 = vadd.f32 %v1911, %v1912
        %v1914 = vsel %vm764, %v1864, 0.0
        %v1915 = vadd.f32 %v1913, %v1914
        %v1916 = vsel %vm764, %v1865, 0.0
        %v1917 = vadd.f32 %v1915, %v1916
        %v1918 = vsel %vm764, %v1866, 0.0
        %v1919 = vadd.f32 %v1917, %v1918
        %v1920 = vsel %vm764, %v1867, 0.0
        %v1921 = vadd.f32 %v1919, %v1920
        %v1922 = vsel %vm764, %v1868, 0.0
        %v1923 = vadd.f32 %v1921, %v1922
        %v1924 = vsel %vm764, %v1869, 0.0
        %v1925 = vadd.f32 %v1923, %v1924
        %v1926 = vsel %vm764, %v1870, 0.0
        %v1927 = vadd.f32 %v1925, %v1926
        %v1928 = vsel %vm764, %v1871, 0.0
        %v1929 = vadd.f32 %v1927, %v1928
        %v1930 = vsel %vm764, %v1872, 0.0
        %v1931 = vadd.f32 %v1929, %v1930
        %v1932 = vsel %vm764, %v1873, 0.0
        %v1933 = vadd.f32 %v1931, %v1932
        %v1934 = vsel %vm764, %v1874, 0.0
        %v1935 = vadd.f32 %v1933, %v1934
        %v1936 = vsel %vm764, %v1875, 0.0
        %v1937 = vadd.f32 %v1935, %v1936
        %v1938 = vsel %vm764, %v1876, 0.0
        %v1939 = vadd.f32 %v1937, %v1938
        %v1940 = vrot.slane %v1939, 4
        %v1941 = vadd.f32 %v1939, %v1940
        %v1942 = vrot.slane %v1941, 2
        %v1943 = vadd.f32 %v1941, %v1942
        %v1944 = vrot.slane %v1943, 1
        %v1945 = vadd.f32 %v1943, %v1944
        %v1946 = vrcp.pop 256.0
        %v1947 = vmul.f32 %v1945, %v1946
        %v1948 = vld [vmem:[%s5] sm:$0xff]
        %v1949 = vld [vmem:[%s5 + $0x8] sm:$0xff]
        %v1950 = vmul.f32 %v1948, %v1947
        %v1951 = vmul.f32 %v1949, %v1947
        %v1952 = vsel %vm764, %v1950, 0.0
        %1953 = vadd.xlane.f32.xlu0 %v1952
        %v1954 = vpop.xlane.xlu0 %1953
        %v1955 = vsel %vm764, %v1951, 0.0
        %1956 = vadd.xlane.f32.xlu0 %v1955
        %v1957 = vpop.xlane.xlu0 %1956
        %v1958 = vmax.f32 %v1954, 0.0
        %v1959 = vmax.f32 %v1957, 0.0
        %v1960 = vld [vmem:[%s6] sm:$0xff]
        %v1961 = vld [vmem:[%s6 + $0x8] sm:$0xff]
        %v1962 = vmul.f32 %v1960, %v1958
        %v1963 = vmul.f32 %v1961, %v1959
        %v1964 = vsel %vm764, %v1962, 0.0
        %v1965 = vsel %vm764, %v1963, 0.0
        %v1966 = vadd.f32 %v1964, %v1965
        %v1967 = vrot.slane %v1966, 4
        %v1968 = vadd.f32 %v1966, %v1967
        %v1969 = vrot.slane %v1968, 2
        %v1970 = vadd.f32 %v1968, %v1969
        %v1971 = vrot.slane %v1970, 1
        %v1972 = vadd.f32 %v1970, %v1971
        %v1973 = vsub.f32 0.0, %v1972
        %v1974 = vmul.f32 %v1973, 1.442695
        %v1975 = vpow.pop %v1974
        %v1976 = vadd.f32 %v1975, 1.0
        %v1977 = vrcp.pop %v1976
        %v1978 = vmul.f32 %v1845, %v1977
        %v1979 = vmul.f32 %v1846, %v1977
        %v1980 = vmul.f32 %v1847, %v1977
        %v1981 = vmul.f32 %v1848, %v1977
        %v1982 = vmul.f32 %v1849, %v1977
        %v1983 = vmul.f32 %v1850, %v1977
        %v1984 = vmul.f32 %v1851, %v1977
        %v1985 = vmul.f32 %v1852, %v1977
        %v1986 = vmul.f32 %v1853, %v1977
        %v1987 = vmul.f32 %v1854, %v1977
        %v1988 = vmul.f32 %v1855, %v1977
        %v1989 = vmul.f32 %v1856, %v1977
        %v1990 = vmul.f32 %v1857, %v1977
        %v1991 = vmul.f32 %v1858, %v1977
        %v1992 = vmul.f32 %v1859, %v1977
        %v1993 = vmul.f32 %v1860, %v1977
        %v1994 = vmul.f32 %v1861, %v1977
        %v1995 = vmul.f32 %v1862, %v1977
        %v1996 = vmul.f32 %v1863, %v1977
        %v1997 = vmul.f32 %v1864, %v1977
        %v1998 = vmul.f32 %v1865, %v1977
        %v1999 = vmul.f32 %v1866, %v1977
        %v2000 = vmul.f32 %v1867, %v1977
        %v2001 = vmul.f32 %v1868, %v1977
        %v2002 = vmul.f32 %v1869, %v1977
        %v2003 = vmul.f32 %v1870, %v1977
        %v2004 = vmul.f32 %v1871, %v1977
        %v2005 = vmul.f32 %v1872, %v1977
        %v2006 = vmul.f32 %v1873, %v1977
        %v2007 = vmul.f32 %v1874, %v1977
        %v2008 = vmul.f32 %v1875, %v1977
        %v2009 = vmul.f32 %v1876, %v1977
        %v2010 = vmax.f32 %v1978, 0.0
        %v2011 = vmax.f32 %v1979, 0.0
        %v2012 = vmax.f32 %v1980, 0.0
        %v2013 = vmax.f32 %v1981, 0.0
        %v2014 = vmax.f32 %v1982, 0.0
        %v2015 = vmax.f32 %v1983, 0.0
        %v2016 = vmax.f32 %v1984, 0.0
        %v2017 = vmax.f32 %v1985, 0.0
        %v2018 = vmax.f32 %v1986, 0.0
        %v2019 = vmax.f32 %v1987, 0.0
        %v2020 = vmax.f32 %v1988, 0.0
        %v2021 = vmax.f32 %v1989, 0.0
        %v2022 = vmax.f32 %v1990, 0.0
        %v2023 = vmax.f32 %v1991, 0.0
        %v2024 = vmax.f32 %v1992, 0.0
        %v2025 = vmax.f32 %v1993, 0.0
        %v2026 = vmax.f32 %v1994, 0.0
        %v2027 = vmax.f32 %v1995, 0.0
        %v2028 = vmax.f32 %v1996, 0.0
        %v2029 = vmax.f32 %v1997, 0.0
        %v2030 = vmax.f32 %v1998, 0.0
        %v2031 = vmax.f32 %v1999, 0.0
        %v2032 = vmax.f32 %v2000, 0.0
        %v2033 = vmax.f32 %v2001, 0.0
        %v2034 = vmax.f32 %v2002, 0.0
        %v2035 = vmax.f32 %v2003, 0.0
        %v2036 = vmax.f32 %v2004, 0.0
        %v2037 = vmax.f32 %v2005, 0.0
        %v2038 = vmax.f32 %v2006, 0.0
        %v2039 = vmax.f32 %v2007, 0.0
        %v2040 = vmax.f32 %v2008, 0.0
        %v2041 = vmax.f32 %v2009, 0.0
        %v2042 = vpack.c.bf16 %v2011, %v2010
        %v2043 = vpack.c.bf16 %v2013, %v2012
        %v2044 = vpack.c.bf16 %v2015, %v2014
        %v2045 = vpack.c.bf16 %v2017, %v2016
        %v2046 = vpack.c.bf16 %v2019, %v2018
        %v2047 = vpack.c.bf16 %v2021, %v2020
        %v2048 = vpack.c.bf16 %v2023, %v2022
        %v2049 = vpack.c.bf16 %v2025, %v2024
        %v2050 = vpack.c.bf16 %v2027, %v2026
        %v2051 = vpack.c.bf16 %v2029, %v2028
        %v2052 = vpack.c.bf16 %v2031, %v2030
        %v2053 = vpack.c.bf16 %v2033, %v2032
        %v2054 = vpack.c.bf16 %v2035, %v2034
        %v2055 = vpack.c.bf16 %v2037, %v2036
        %v2056 = vpack.c.bf16 %v2039, %v2038
        %v2057 = vpack.c.bf16 %v2041, %v2040
        %v2058 = vld [vmem:[%s7] sm:$0xf]
        %v2059 = vld [vmem:[%s7 + $0x4] sm:$0xf]
        %v2060 = vld [vmem:[%s7 + $0x8] sm:$0xf]
        %v2061 = vld [vmem:[%s7 + $0xc] sm:$0xf]
        %v2062 = vld [vmem:[%s7 + $0x10] sm:$0xf]
        %v2063 = vld [vmem:[%s7 + $0x14] sm:$0xf]
        %v2064 = vld [vmem:[%s7 + $0x18] sm:$0xf]
        %v2065 = vld [vmem:[%s7 + $0x1c] sm:$0xf]
        %v2074 = vunpack.c.l.b16 %v2058
        %v2075 = vunpack.c.l.b16 %v2059
        %v2076 = vunpack.c.l.b16 %v2060
        %v2077 = vunpack.c.l.b16 %v2061
        %v2078 = vunpack.c.l.b16 %v2062
        %v2079 = vunpack.c.l.b16 %v2063
        %v2080 = vunpack.c.l.b16 %v2064
        %v2081 = vunpack.c.l.b16 %v2065
        %v2082 = vpack.c.b16 %v2075, %v2074
        %v2083 = vpack.c.b16 %v2077, %v2076
        %v2084 = vpack.c.b16 %v2079, %v2078
        %v2085 = vpack.c.b16 %v2081, %v2080
        %v2091 = vsel %vm764, %v2042, 0
        %v2094 = vsel %vm764, %v2043, 0
        %v2097 = vsel %vm764, %v2044, 0
        %v2100 = vsel %vm764, %v2045, 0
        %v2103 = vsel %vm764, %v2046, 0
        %v2106 = vsel %vm764, %v2047, 0
        %v2109 = vsel %vm764, %v2048, 0
        %v2112 = vsel %vm764, %v2049, 0
        %v2115 = vsel %vm764, %v2050, 0
        %v2118 = vsel %vm764, %v2051, 0
        %v2121 = vsel %vm764, %v2052, 0
        %v2124 = vsel %vm764, %v2053, 0
        %v2127 = vsel %vm764, %v2054, 0
        %v2130 = vsel %vm764, %v2055, 0
        %v2133 = vsel %vm764, %v2056, 0
        %v2136 = vsel %vm764, %v2057, 0
        %2138 = vmatprep.subr.bf16.mxu0 0
        %2139 = vmatpush1.bf16.msra.mxu0 0
        %2140 = vmatprep.subr.bf16.mxu0 0
        %2141 = vmatpush1.bf16.msra.mxu0 0
        %2142 = vmatprep.subr.bf16.mxu0 0
        %2143 = vmatpush1.bf16.msra.mxu0 0
        %2144 = vmatprep.subr.bf16.mxu0 0
        %2145 = vmatpush1.bf16.msra.mxu0 0
        %2146 = vmatprep.subr.bf16.mxu0 0
        %2147 = vmatpush1.bf16.msra.mxu0 %v2085
        %2148 = vmatprep.subr.bf16.mxu0 0
        %2149 = vmatpush1.bf16.msra.mxu0 %v2084
        %2150 = vmatprep.subr.bf16.mxu0 0
        %2151 = vmatpush1.bf16.msra.mxu0 %v2083
        %2152 = vmatprep.subr.bf16.mxu0 0
        %2153 = vmatpush1.bf16.msra.mxu0 %v2082
        %2154 = vmatprep.subr.bf16.mxu0 0
        %2155 = vmatpush2.bf16.msra.mxu0 0
        %2156 = vmatprep.subr.bf16.mxu0 0
        %2157 = vmatpush2.bf16.msra.mxu0 0
        %2158 = vmatprep.subr.bf16.mxu0 0
        %2159 = vmatpush2.bf16.msra.mxu0 0
        %2160 = vmatprep.subr.bf16.mxu0 0
        %2161 = vmatpush2.bf16.msra.mxu0 0
        %2162 = vmatprep.subr.bf16.mxu0 0
        %2163 = vmatpush2.bf16.msra.mxu0 0
        %2164 = vmatprep.subr.bf16.mxu0 0
        %2165 = vmatpush2.bf16.msra.mxu0 0
        %2166 = vmatprep.subr.bf16.mxu0 0
        %2167 = vmatpush2.bf16.msra.mxu0 0
        %2168 = vmatprep.subr.bf16.mxu0 0
        %2169 = vmatpush2.bf16.msra.mxu0 0
        %2170 = vmatprep.mubr.bf16.mxu0 0
        %2171 = vmatmul.mubr.bf16.gmra.mxu0 %v2091
        %v2172 = vpop.f32.mrf.mxu0
        %v2173 = vadd.f32 0.0, %v2172
        %v2174 = vpop.f32.mrf.mxu0
        %v2175 = vpop.f32.mrf.mxu0
        %v2176 = vadd.f32 0.0, %v2175
        %v2177 = vpop.f32.mrf.mxu0
        %2178 = vmatprep.mubr.bf16.mxu0 0
        %2179 = vmatmul.mubr.bf16.gmra.mxu0 %v2094
        %v2180 = vpop.f32.mrf.mxu0
        %v2181 = vadd.f32 0.0, %v2180
        %v2182 = vpop.f32.mrf.mxu0
        %v2183 = vpop.f32.mrf.mxu0
        %v2184 = vadd.f32 0.0, %v2183
        %v2185 = vpop.f32.mrf.mxu0
        %2186 = vmatprep.mubr.bf16.mxu0 0
        %2187 = vmatmul.mubr.bf16.gmra.mxu0 %v2097
        %v2188 = vpop.f32.mrf.mxu0
        %v2189 = vadd.f32 0.0, %v2188
        %v2190 = vpop.f32.mrf.mxu0
        %v2191 = vpop.f32.mrf.mxu0
        %v2192 = vadd.f32 0.0, %v2191
        %v2193 = vpop.f32.mrf.mxu0
        %2194 = vmatprep.mubr.bf16.mxu0 0
        %2195 = vmatmul.mubr.bf16.gmra.mxu0 %v2100
        %v2196 = vpop.f32.mrf.mxu0
        %v2197 = vadd.f32 0.0, %v2196
        %v2198 = vpop.f32.mrf.mxu0
        %v2199 = vpop.f32.mrf.mxu0
        %v2200 = vadd.f32 0.0, %v2199
        %v2201 = vpop.f32.mrf.mxu0
        %2202 = vmatprep.mubr.bf16.mxu0 0
        %2203 = vmatmul.mubr.bf16.gmra.mxu0 %v2103
        %v2204 = vpop.f32.mrf.mxu0
        %v2205 = vadd.f32 0.0, %v2204
        %v2206 = vpop.f32.mrf.mxu0
        %v2207 = vpop.f32.mrf.mxu0
        %v2208 = vadd.f32 0.0, %v2207
        %v2209 = vpop.f32.mrf.mxu0
        %2210 = vmatprep.mubr.bf16.mxu0 0
        %2211 = vmatmul.mubr.bf16.gmra.mxu0 %v2106
        %v2212 = vpop.f32.mrf.mxu0
        %v2213 = vadd.f32 0.0, %v2212
        %v2214 = vpop.f32.mrf.mxu0
        %v2215 = vpop.f32.mrf.mxu0
        %v2216 = vadd.f32 0.0, %v2215
        %v2217 = vpop.f32.mrf.mxu0
        %2218 = vmatprep.mubr.bf16.mxu0 0
        %2219 = vmatmul.mubr.bf16.gmra.mxu0 %v2109
        %v2220 = vpop.f32.mrf.mxu0
        %v2221 = vadd.f32 0.0, %v2220
        %v2222 = vpop.f32.mrf.mxu0
        %v2223 = vpop.f32.mrf.mxu0
        %v2224 = vadd.f32 0.0, %v2223
        %v2225 = vpop.f32.mrf.mxu0
        %2226 = vmatprep.mubr.bf16.mxu0 0
        %2227 = vmatmul.mubr.bf16.gmra.mxu0 %v2112
        %v2228 = vpop.f32.mrf.mxu0
        %v2229 = vadd.f32 0.0, %v2228
        %v2230 = vpop.f32.mrf.mxu0
        %v2231 = vpop.f32.mrf.mxu0
        %v2232 = vadd.f32 0.0, %v2231
        %v2233 = vpop.f32.mrf.mxu0
        %2234 = vmatprep.mubr.bf16.mxu0 0
        %2235 = vmatmul.mubr.bf16.gmra.mxu0 %v2115
        %v2236 = vpop.f32.mrf.mxu0
        %v2237 = vadd.f32 0.0, %v2236
        %v2238 = vpop.f32.mrf.mxu0
        %v2239 = vpop.f32.mrf.mxu0
        %v2240 = vadd.f32 0.0, %v2239
        %v2241 = vpop.f32.mrf.mxu0
        %2242 = vmatprep.mubr.bf16.mxu0 0
        %2243 = vmatmul.mubr.bf16.gmra.mxu0 %v2118
        %v2244 = vpop.f32.mrf.mxu0
        %v2245 = vadd.f32 0.0, %v2244
        %v2246 = vpop.f32.mrf.mxu0
        %v2247 = vpop.f32.mrf.mxu0
        %v2248 = vadd.f32 0.0, %v2247
        %v2249 = vpop.f32.mrf.mxu0
        %2250 = vmatprep.mubr.bf16.mxu0 0
        %2251 = vmatmul.mubr.bf16.gmra.mxu0 %v2121
        %v2252 = vpop.f32.mrf.mxu0
        %v2253 = vadd.f32 0.0, %v2252
        %v2254 = vpop.f32.mrf.mxu0
        %v2255 = vpop.f32.mrf.mxu0
        %v2256 = vadd.f32 0.0, %v2255
        %v2257 = vpop.f32.mrf.mxu0
        %2258 = vmatprep.mubr.bf16.mxu0 0
        %2259 = vmatmul.mubr.bf16.gmra.mxu0 %v2124
        %v2260 = vpop.f32.mrf.mxu0
        %v2261 = vadd.f32 0.0, %v2260
        %v2262 = vpop.f32.mrf.mxu0
        %v2263 = vpop.f32.mrf.mxu0
        %v2264 = vadd.f32 0.0, %v2263
        %v2265 = vpop.f32.mrf.mxu0
        %2266 = vmatprep.mubr.bf16.mxu0 0
        %2267 = vmatmul.mubr.bf16.gmra.mxu0 %v2127
        %v2268 = vpop.f32.mrf.mxu0
        %v2269 = vadd.f32 0.0, %v2268
        %v2270 = vpop.f32.mrf.mxu0
        %v2271 = vpop.f32.mrf.mxu0
        %v2272 = vadd.f32 0.0, %v2271
        %v2273 = vpop.f32.mrf.mxu0
        %2274 = vmatprep.mubr.bf16.mxu0 0
        %2275 = vmatmul.mubr.bf16.gmra.mxu0 %v2130
        %v2276 = vpop.f32.mrf.mxu0
        %v2277 = vadd.f32 0.0, %v2276
        %v2278 = vpop.f32.mrf.mxu0
        %v2279 = vpop.f32.mrf.mxu0
        %v2280 = vadd.f32 0.0, %v2279
        %v2281 = vpop.f32.mrf.mxu0
        %2282 = vmatprep.mubr.bf16.mxu0 0
        %2283 = vmatmul.mubr.bf16.gmra.mxu0 %v2133
        %v2284 = vpop.f32.mrf.mxu0
        %v2285 = vadd.f32 0.0, %v2284
        %v2286 = vpop.f32.mrf.mxu0
        %v2287 = vpop.f32.mrf.mxu0
        %v2288 = vadd.f32 0.0, %v2287
        %v2289 = vpop.f32.mrf.mxu0
        %2290 = vmatprep.mubr.bf16.mxu0 0
        %2291 = vmatmul.mubr.bf16.gmra.mxu0 %v2136
        %v2292 = vpop.f32.mrf.mxu0
        %v2293 = vadd.f32 0.0, %v2292
        %v2294 = vpop.f32.mrf.mxu0
        %v2295 = vpop.f32.mrf.mxu0
        %v2296 = vadd.f32 0.0, %v2295
        %v2297 = vpop.f32.mrf.mxu0
        %2298 = vdwg.mxu0
        %v2299 = vld [vmem:[%s8] sm:$0x1]
        %v2300 = vlaneseq
        %v2301 = vshrl.u32 %v2300, 7
        %v2302 = vsub.s32 0, %v2301
        %v2303 = vrot.slane %v2299, %v2302
        %v2304 = vmul.f32 %v2173, %v2303
        %v2305 = vmul.f32 %v2176, %v2303
        %v2306 = vmul.f32 %v2181, %v2303
        %v2307 = vmul.f32 %v2184, %v2303
        %v2308 = vmul.f32 %v2189, %v2303
        %v2309 = vmul.f32 %v2192, %v2303
        %v2310 = vmul.f32 %v2197, %v2303
        %v2311 = vmul.f32 %v2200, %v2303
        %v2312 = vmul.f32 %v2205, %v2303
        %v2313 = vmul.f32 %v2208, %v2303
        %v2314 = vmul.f32 %v2213, %v2303
        %v2315 = vmul.f32 %v2216, %v2303
        %v2316 = vmul.f32 %v2221, %v2303
        %v2317 = vmul.f32 %v2224, %v2303
        %v2318 = vmul.f32 %v2229, %v2303
        %v2319 = vmul.f32 %v2232, %v2303
        %v2320 = vmul.f32 %v2237, %v2303
        %v2321 = vmul.f32 %v2240, %v2303
        %v2322 = vmul.f32 %v2245, %v2303
        %v2323 = vmul.f32 %v2248, %v2303
        %v2324 = vmul.f32 %v2253, %v2303
        %v2325 = vmul.f32 %v2256, %v2303
        %v2326 = vmul.f32 %v2261, %v2303
        %v2327 = vmul.f32 %v2264, %v2303
        %v2328 = vmul.f32 %v2269, %v2303
        %v2329 = vmul.f32 %v2272, %v2303
        %v2330 = vmul.f32 %v2277, %v2303
        %v2331 = vmul.f32 %v2280, %v2303
        %v2332 = vmul.f32 %v2285, %v2303
        %v2333 = vmul.f32 %v2288, %v2303
        %v2334 = vmul.f32 %v2293, %v2303
        %v2335 = vmul.f32 %v2296, %v2303
        %v2336 = vld [vmem:[%s8 + $0x1] sm:$0x1]
        %v2337 = vlaneseq
        %v2338 = vshrl.u32 %v2337, 7
        %v2339 = vsub.s32 0, %v2338
        %v2340 = vrot.slane %v2336, %v2339
        %v2341 = vadd.f32 %v2304, %v2340
        %v2342 = vadd.f32 %v2305, %v2340
        %v2343 = vadd.f32 %v2306, %v2340
        %v2344 = vadd.f32 %v2307, %v2340
        %v2345 = vadd.f32 %v2308, %v2340
        %v2346 = vadd.f32 %v2309, %v2340
        %v2347 = vadd.f32 %v2310, %v2340
        %v2348 = vadd.f32 %v2311, %v2340
        %v2349 = vadd.f32 %v2312, %v2340
        %v2350 = vadd.f32 %v2313, %v2340
        %v2351 = vadd.f32 %v2314, %v2340
        %v2352 = vadd.f32 %v2315, %v2340
        %v2353 = vadd.f32 %v2316, %v2340
        %v2354 = vadd.f32 %v2317, %v2340
        %v2355 = vadd.f32 %v2318, %v2340
        %v2356 = vadd.f32 %v2319, %v2340
        %v2357 = vadd.f32 %v2320, %v2340
        %v2358 = vadd.f32 %v2321, %v2340
        %v2359 = vadd.f32 %v2322, %v2340
        %v2360 = vadd.f32 %v2323, %v2340
        %v2361 = vadd.f32 %v2324, %v2340
        %v2362 = vadd.f32 %v2325, %v2340
        %v2363 = vadd.f32 %v2326, %v2340
        %v2364 = vadd.f32 %v2327, %v2340
        %v2365 = vadd.f32 %v2328, %v2340
        %v2366 = vadd.f32 %v2329, %v2340
        %v2367 = vadd.f32 %v2330, %v2340
        %v2368 = vadd.f32 %v2331, %v2340
        %v2369 = vadd.f32 %v2332, %v2340
        %v2370 = vadd.f32 %v2333, %v2340
        %v2371 = vadd.f32 %v2334, %v2340
        %v2372 = vadd.f32 %v2335, %v2340
        %v2373 = vld [vmem:[%s344] sm:$0xff]
        %v2374 = vld [vmem:[%s344 + $0x8] sm:$0xff]
        %v2375 = vld [vmem:[%s344 + $0x10] sm:$0xff]
        %v2376 = vld [vmem:[%s344 + $0x18] sm:$0xff]
        %v2377 = vld [vmem:[%s344 + $0x20] sm:$0xff]
        %v2378 = vld [vmem:[%s344 + $0x28] sm:$0xff]
        %v2379 = vld [vmem:[%s344 + $0x30] sm:$0xff]
        %v2380 = vld [vmem:[%s344 + $0x38] sm:$0xff]
        %v2381 = vld [vmem:[%s344 + $0x40] sm:$0xff]
        %v2382 = vld [vmem:[%s344 + $0x48] sm:$0xff]
        %v2383 = vld [vmem:[%s344 + $0x50] sm:$0xff]
        %v2384 = vld [vmem:[%s344 + $0x58] sm:$0xff]
        %v2385 = vld [vmem:[%s344 + $0x60] sm:$0xff]
        %v2386 = vld [vmem:[%s344 + $0x68] sm:$0xff]
        %v2387 = vld [vmem:[%s344 + $0x70] sm:$0xff]
        %v2388 = vld [vmem:[%s344 + $0x78] sm:$0xff]
        %v2389 = vld [vmem:[%s344 + $0x80] sm:$0xff]
        %v2390 = vld [vmem:[%s344 + $0x88] sm:$0xff]
        %v2391 = vld [vmem:[%s344 + $0x90] sm:$0xff]
        %v2392 = vld [vmem:[%s344 + $0x98] sm:$0xff]
        %v2393 = vld [vmem:[%s344 + $0xa0] sm:$0xff]
        %v2394 = vld [vmem:[%s344 + $0xa8] sm:$0xff]
        %v2395 = vld [vmem:[%s344 + $0xb0] sm:$0xff]
        %v2396 = vld [vmem:[%s344 + $0xb8] sm:$0xff]
        %v2397 = vld [vmem:[%s344 + $0xc0] sm:$0xff]
        %v2398 = vld [vmem:[%s344 + $0xc8] sm:$0xff]
        %v2399 = vld [vmem:[%s344 + $0xd0] sm:$0xff]
        %v2400 = vld [vmem:[%s344 + $0xd8] sm:$0xff]
        %v2401 = vld [vmem:[%s344 + $0xe0] sm:$0xff]
        %v2402 = vld [vmem:[%s344 + $0xe8] sm:$0xff]
        %v2403 = vld [vmem:[%s344 + $0xf0] sm:$0xff]
        %v2404 = vld [vmem:[%s344 + $0xf8] sm:$0xff]
        %v2405 = vadd.f32 %v2341, %v2373
        %v2406 = vadd.f32 %v2342, %v2374
        %v2407 = vadd.f32 %v2343, %v2375
        %v2408 = vadd.f32 %v2344, %v2376
        %v2409 = vadd.f32 %v2345, %v2377
        %v2410 = vadd.f32 %v2346, %v2378
        %v2411 = vadd.f32 %v2347, %v2379
        %v2412 = vadd.f32 %v2348, %v2380
        %v2413 = vadd.f32 %v2349, %v2381
        %v2414 = vadd.f32 %v2350, %v2382
        %v2415 = vadd.f32 %v2351, %v2383
        %v2416 = vadd.f32 %v2352, %v2384
        %v2417 = vadd.f32 %v2353, %v2385
        %v2418 = vadd.f32 %v2354, %v2386
        %v2419 = vadd.f32 %v2355, %v2387
        %v2420 = vadd.f32 %v2356, %v2388
        %v2421 = vadd.f32 %v2357, %v2389
        %v2422 = vadd.f32 %v2358, %v2390
        %v2423 = vadd.f32 %v2359, %v2391
        %v2424 = vadd.f32 %v2360, %v2392
        %v2425 = vadd.f32 %v2361, %v2393
        %v2426 = vadd.f32 %v2362, %v2394
        %v2427 = vadd.f32 %v2363, %v2395
        %v2428 = vadd.f32 %v2364, %v2396
        %v2429 = vadd.f32 %v2365, %v2397
        %v2430 = vadd.f32 %v2366, %v2398
        %v2431 = vadd.f32 %v2367, %v2399
        %v2432 = vadd.f32 %v2368, %v2400
        %v2433 = vadd.f32 %v2369, %v2401
        %v2434 = vadd.f32 %v2370, %v2402
        %v2435 = vadd.f32 %v2371, %v2403
        %v2436 = vadd.f32 %v2372, %v2404
        %2437 = vst.msk [vmem:[%s390] sm:$0xff] %vm448, %v2405
        %2438 = vst.msk [vmem:[%s390 + $0x8] sm:$0xff] %vm448, %v2406
        %2439 = vst.msk [vmem:[%s390 + $0x10] sm:$0xff] %vm448, %v2407
        %2440 = vst.msk [vmem:[%s390 + $0x18] sm:$0xff] %vm448, %v2408
        %2441 = vst.msk [vmem:[%s390 + $0x20] sm:$0xff] %vm448, %v2409
        %2442 = vst.msk [vmem:[%s390 + $0x28] sm:$0xff] %vm448, %v2410
        %2443 = vst.msk [vmem:[%s390 + $0x30] sm:$0xff] %vm448, %v2411
        %2444 = vst.msk [vmem:[%s390 + $0x38] sm:$0xff] %vm448, %v2412
        %2445 = vst.msk [vmem:[%s390 + $0x40] sm:$0xff] %vm448, %v2413
        %2446 = vst.msk [vmem:[%s390 + $0x48] sm:$0xff] %vm448, %v2414
        %2447 = vst.msk [vmem:[%s390 + $0x50] sm:$0xff] %vm448, %v2415
        %2448 = vst.msk [vmem:[%s390 + $0x58] sm:$0xff] %vm448, %v2416
        %2449 = vst.msk [vmem:[%s390 + $0x60] sm:$0xff] %vm448, %v2417
        %2450 = vst.msk [vmem:[%s390 + $0x68] sm:$0xff] %vm448, %v2418
        %2451 = vst.msk [vmem:[%s390 + $0x70] sm:$0xff] %vm448, %v2419
        %2452 = vst.msk [vmem:[%s390 + $0x78] sm:$0xff] %vm448, %v2420
        %2453 = vst.msk [vmem:[%s390 + $0x80] sm:$0xff] %vm448, %v2421
        %2454 = vst.msk [vmem:[%s390 + $0x88] sm:$0xff] %vm448, %v2422
        %2455 = vst.msk [vmem:[%s390 + $0x90] sm:$0xff] %vm448, %v2423
        %2456 = vst.msk [vmem:[%s390 + $0x98] sm:$0xff] %vm448, %v2424
        %2457 = vst.msk [vmem:[%s390 + $0xa0] sm:$0xff] %vm448, %v2425
        %2458 = vst.msk [vmem:[%s390 + $0xa8] sm:$0xff] %vm448, %v2426
        %2459 = vst.msk [vmem:[%s390 + $0xb0] sm:$0xff] %vm448, %v2427
        %2460 = vst.msk [vmem:[%s390 + $0xb8] sm:$0xff] %vm448, %v2428
        %2461 = vst.msk [vmem:[%s390 + $0xc0] sm:$0xff] %vm448, %v2429
        %2462 = vst.msk [vmem:[%s390 + $0xc8] sm:$0xff] %vm448, %v2430
        %2463 = vst.msk [vmem:[%s390 + $0xd0] sm:$0xff] %vm448, %v2431
        %2464 = vst.msk [vmem:[%s390 + $0xd8] sm:$0xff] %vm448, %v2432
        %2465 = vst.msk [vmem:[%s390 + $0xe0] sm:$0xff] %vm448, %v2433
        %2466 = vst.msk [vmem:[%s390 + $0xe8] sm:$0xff] %vm448, %v2434
        %2467 = vst.msk [vmem:[%s390 + $0xf0] sm:$0xff] %vm448, %v2435
        %2468 = vst.msk [vmem:[%s390 + $0xf8] sm:$0xff] %vm448, %v2436
        %s2469 = sand.u32 %s230, 1
        %s2470 = scalar_lea.sflag [#allocation6], %s2469
        %s2471 = sand.u32 %s230, 1
        %s2472 = smul.addr %s2471, 256
        %s2473 = scalar_lea.vmem [#allocation12], %s2472
        // Predicated region
        $region73: #{tpu_custom_call.1} parent=55 // pred_check
          %p2474 = pneg %p240
        $region74: #{tpu_custom_call.1} parent=55 // pred_check_branch
          %2476 = sbr.rel (%p2474) target = $region76
        $region75: #{tpu_custom_call.1} parent=55 // pred_region
          %s2478 = ssub.s32 4096, 4096
          %2479 = vsyncadd %s2470, %s2478
          %s2480 = smul.addr %s28, 32
          %s2481 = smul.addr %s2480, 128
          %s2482 = scalar_lea.hbm %s9, %s2481
          %s2483 = sshll.u32 %s2473, 4
          %s2484 = int_to_ptr.vmem [resolvable:$true] %s2483
          %2489 = dma.vmem_to_hbm [thread:$0]  %s2484, 4096, %s2482, %s2470, 128, 128, 8
        $region76: #{tpu_custom_call.1} parent=55 // pred_fallthru
          _
      $region56: #{tpu_custom_call.1} parent=5 // pred_fallthru
        _
      %p2490 = scmp.le.s32.totalorder 2, %s23
      // Predicated region
      $region77: #{tpu_custom_call.1} parent=5 // pred_check
        %p2491 = pneg %p2490
      $region78: #{tpu_custom_call.1} parent=5 // pred_check_branch
        %2493 = sbr.rel (%p2491) target = $region80
      $region79: #{tpu_custom_call.1} parent=5 // pred_region
        %s2494 = ssub.s32 %s23, 2
        // Predicated region
        $region81: #{tpu_custom_call.1} parent=79 // pred_check
          %p2495 = pneg %p246
        $region82: #{tpu_custom_call.1} parent=79 // pred_check_branch
          %2497 = sbr.rel (%p2495) target = $region84
        $region83: #{tpu_custom_call.1} parent=79 // pred_region
          %s2498 = sand.u32 %s231, 1
          %s2499 = scalar_lea.sflag [#allocation6], %s2498
          %s2500 = sand.u32 %s231, 1
          %s2501 = smul.addr %s2500, 256
          %s2502 = scalar_lea.vmem [#allocation12], %s2501
          %2503 = dma.done %s2499, 4096
        $region84: #{tpu_custom_call.1} parent=79 // pred_fallthru
          _
      $region80: #{tpu_custom_call.1} parent=5 // pred_fallthru
        _
    $region6: #{tpu_custom_call.1} parent=1 // loop_footer
      %s27 = sadd.s32 1, %s23
    $region7: #{tpu_custom_call.1} parent=1 // loop_footer_branch
      %22 = sbr.rel target = $region3
    $region8: #{tpu_custom_call.1} parent=1 // loop_exit
      _
    %2504 = vsyncpa [#allocation5], 1
    %s2505 = scalar_lea.sflag [#allocation5], 1
    %2506 = vsyncpa %s2505, 1
    %2507 = vsyncpa [#allocation8], 1
    %2508 = vsyncpa [#allocation11], 1
    %2509 = vsyncpa [#allocation6], 1
    %s2510 = scalar_lea.sflag [#allocation6], 1
    %2511 = vsyncpa %s2510, 1

</llo_original>
